<compile_context>
chip_gen: v7x
topology: tpu7x:2x2x1
jax: 0.10.0
libtpu: 0.0.40
codegen_flags: <defaults>
</compile_context>

<pallas_src>
import functools
import math

import jax
import jax.numpy as jnp
from jax.experimental import pallas as pl
from jax.experimental.pallas import tpu as pltpu

_PACKED_ORDER = ["wqkv", "bqkv", "wo", "bo", "wg1", "bg1",
                 "w1", "b1", "w2", "b2", "wg2", "bg2", "wp", "bp"]


def _round_up(n, m):
    return ((n + m - 1) // m) * m


def _layer_kernel(lens_ref, h_ref,
                  wqkv, bqkv, wo, bo,
                  wg1, bg1, w1, b1, w2, b2,
                  wg2, bg2, wp, bp,
                  out_ref, *, n_heads, dp, d_model, sty_dim, half_win, eps):
    f32, bf16 = jnp.float32, jnp.bfloat16
    bidx = pl.program_id(0)
    length = lens_ref[bidx]

    h = h_ref[0].astype(f32)                       # (T, Hp) padded hidden (layer input)
    T, Hp = h.shape
    Ap = n_heads * dp                              # per-head 128-aligned attention width

    t_col = jax.lax.broadcasted_iota(jnp.int32, (T, 1), 0)
    t_row = jax.lax.broadcasted_iota(jnp.int32, (1, T), 1)
    maskf = (t_col < length).astype(f32)           # (T, 1) query-side validity
    # Additive key-side mask only; invalid query rows are discarded downstream, so no
    # (T, T) mask is ever materialized.
    key_bias = jnp.where(t_row < length, 0.0, -1e4)

    x = h * maskf                                  # x = x * x_mask

    # ---------------- multi-head self-attention (fused, head-block-aligned QKV) --------
    # 1/sqrt(d_head) is folded into the Q weights/bias at pack time; each head's Q/K/V
    # occupies a 128-lane-aligned block, so the slices below never cut a (8,128) tile.
    qkv = jnp.dot(x.astype(bf16), wqkv[...], preferred_element_type=f32) + bqkv[...]
    ctx_heads = []
    for hh in range(n_heads):                      # only the softmax core is per-head
        q = qkv[:, hh * dp:(hh + 1) * dp]
        k = qkv[:, Ap + hh * dp:Ap + (hh + 1) * dp]
        v = qkv[:, 2 * Ap + hh * dp:2 * Ap + (hh + 1) * dp]
        s = jax.lax.dot_general(q.astype(bf16), k.astype(bf16),
                                (((1,), (1,)), ((), ())),
                                preferred_element_type=f32) + key_bias
        pr = jax.nn.softmax(s, axis=-1)
        ctx_heads.append(jnp.dot(pr.astype(bf16), v.astype(bf16),
                                 preferred_element_type=f32))
    ctx = jnp.concatenate(ctx_heads, axis=-1) if n_heads > 1 else ctx_heads[0]
    y = jnp.dot(ctx.astype(bf16), wo[...], preferred_element_type=f32) + bo[...]

    # ------------- banded window machinery (hoisted; shared by both norm calls) ---------
    W = 2 * half_win + 1

    def shift_rows(a, k):
        if k == 0:
            return a
        return jnp.concatenate([a[k:, :], jnp.zeros((k, a.shape[-1]), a.dtype)], axis=0)

    def windowed_sum(v):
        # v: (T, C), zero outside valid frames.
        # result[t] = sum_{u=t-hw}^{t+hw, 0<=u<T} v[u], computed with log-step doubling:
        # build width-2^k running sums, then compose W greedily from the largest block
        # down, so later shift offsets stay sublane-aligned (e.g. 17 = 16@0 + 1@16).
        C = v.shape[-1]
        zpad = jnp.zeros((half_win, C), f32)
        vp = jnp.concatenate([zpad, v, zpad], axis=0)          # (T + 2*hw, C)
        sums = [vp]                                            # sums[k][i] = width-2^k sum
        w = 1
        while w * 2 <= W:
            sums.append(sums[-1] + shift_rows(sums[-1], w))
            w *= 2
        acc, off, rem = None, 0, W
        for kk in range(len(sums) - 1, -1, -1):
            pw = 1 << kk
            if rem >= pw:
                piece = shift_rows(sums[kk], off)
                acc = piece if acc is None else acc + piece
                off += pw
                rem -= pw
        return acc[:T, :]

    # valid-frame count per window, analytic & hoisted out of both adawin calls
    upper = jnp.minimum(jnp.minimum(t_col + half_win, T - 1), length - 1)
    lower = jnp.maximum(t_col - half_win, 0)
    cnt = jnp.maximum((upper - lower + 1).astype(f32), 1.0)     # (T, 1)
    inv_cnt = pl.reciprocal(cnt, approx=True)
    inv_tot = 1.0 / jnp.maximum(length, 1).astype(f32)          # scalar; once per layer

    def adawin(z, wg, bg):
        zm = z * maskf
        c = jnp.sum(zm, axis=0, keepdims=True) * inv_tot        # (1, Hp) global center
        zc = (z - c) * maskf                                    # zero at invalid frames
        ws = windowed_sum(jnp.concatenate([zc, zc * zc], axis=-1))   # one banded pass
        mean_c = ws[:, :Hp] * inv_cnt
        msq_c = ws[:, Hp:] * inv_cnt
        var = jnp.maximum(msq_c - mean_c * mean_c, 0.0)
        zn = ((z - c) - mean_c) * jax.lax.rsqrt(var + eps)
        # gamma|beta projection: style rows lifted into the full Hp hidden (aligned K=Hp
        # contraction against the raw layer input; non-style rows of wg are zero).
        gb = jnp.dot(h.astype(bf16), wg[...], preferred_element_type=f32) + bg[...]
        gamma = gb[:, :Hp]
        beta = gb[:, Hp:]
        return (1.0 + gamma) * zn + beta

    x1 = adawin(x + y, wg1, bg1)

    # ---------------- FFN (kernel_size == 1) ---------------------------------------------
    h1 = jnp.dot((x1 * maskf).astype(bf16), w1[...], preferred_element_type=f32) + b1[...]
    h1 = jnp.maximum(h1, 0.0)
    y2 = (jnp.dot((h1 * maskf).astype(bf16), w2[...], preferred_element_type=f32)
          + b2[...]) * maskf

    x2 = adawin(x1 + y2, wg2, bg2)

    # -------- 1x1 projection + style re-concat as a lane-masked add (no concatenate) -----
    xp = jnp.dot(x2.astype(bf16), wp[...], preferred_element_type=f32) + bp[...]  # (T, Hp)
    lane = jax.lax.broadcasted_iota(jnp.int32, (1, Hp), 1)
    style_mask = ((lane >= d_model) & (lane < d_model + sty_dim)).astype(f32)
    out_ref[0] = (xp + h * style_mask).astype(out_ref.dtype)


def _pack_layer(p, *, d_model, sty_dim, n_heads):
    """Fuse / pad per-layer torch-style weights into the kernel's packed layout."""
    H = d_model + sty_dim
    d_head = H // n_heads
    Hp = _round_up(H, 128)
    dp = _round_up(d_head, 128)       # per-head padded width (lane aligned)
    Ap = n_heads * dp
    Fp = _round_up(2 * H, 128)
    scale = 1.0 / math.sqrt(d_head)
    bf16 = jnp.bfloat16

    def pad_to(w, rows, cols):
        return jnp.pad(w, ((0, rows - w.shape[0]), (0, cols - w.shape[1])))

    # --- QKV packed with per-head 128-lane-aligned blocks; scale folded into Q ----------
    wqkv = jnp.zeros((Hp, 3 * Ap), jnp.float32)
    bqkv = jnp.zeros((1, 3 * Ap), jnp.float32)
    srcs = [(p["wq"] * scale, p["bq"] * scale), (p["wk"], p["bk"]), (p["wv"], p["bv"])]
    for g, (w, b) in enumerate(srcs):
        for hh in range(n_heads):
            col = g * Ap + hh * dp
            wqkv = wqkv.at[:H, col:col + d_head].set(w[:, hh * d_head:(hh + 1) * d_head])
            bqkv = bqkv.at[:, col:col + d_head].set(b[:, hh * d_head:(hh + 1) * d_head])

    # --- output projection: rows expanded to per-head padded blocks ---------------------
    wo = jnp.zeros((Ap, Hp), jnp.float32)
    for hh in range(n_heads):
        wo = wo.at[hh * dp:hh * dp + d_head, :H].set(
            p["wo"][hh * d_head:(hh + 1) * d_head, :])
    bo = pad_to(p["bo"], 1, Hp)

    # --- gamma/beta projection: style rows lifted into the full-Hp hidden ---------------
    def pack_norm(wg, bg):
        w = jnp.zeros((Hp, 2 * Hp), jnp.float32)
        w = w.at[d_model:d_model + sty_dim, :H].set(wg[0])
        w = w.at[d_model:d_model + sty_dim, Hp:Hp + H].set(wg[1])
        b = jnp.zeros((1, 2 * Hp), jnp.float32)
        b = b.at[:, :H].set(bg[0])
        b = b.at[:, Hp:Hp + H].set(bg[1])
        return w.astype(bf16), b

    wg1, bg1 = pack_norm(p["wg1"], p["bg1"])
    wg2, bg2 = pack_norm(p["wg2"], p["bg2"])

    # --- final 1x1 projection folded into a full-Hp lane-dense output -------------------
    wp = jnp.zeros((Hp, Hp), jnp.float32)
    wp = wp.at[:H, :d_model].set(p["wp"])
    bp = jnp.zeros((1, Hp), jnp.float32)
    bp = bp.at[:, :d_model].set(p["bp"])

    return {
        "wqkv": wqkv.astype(bf16), "bqkv": bqkv,
        "wo": wo.astype(bf16),     "bo": bo,
        "wg1": wg1, "bg1": bg1,
        "w1": pad_to(p["w1"], Hp, Fp).astype(bf16), "b1": pad_to(p["b1"], 1, Fp),
        "w2": pad_to(p["w2"], Fp, Hp).astype(bf16), "b2": pad_to(p["b2"], 1, Hp),
        "wg2": wg2, "bg2": bg2,
        "wp": wp.astype(bf16), "bp": bp,
    }


def _run_layer(lengths, h, packed, *, n_heads, dp, d_model, sty_dim, half_win):
    B, T, Hp = h.shape
    flat = [packed[k] for k in _PACKED_ORDER]

    def xmap(b, lens):
        return (b, 0, 0)

    def wmap(b, lens):
        return (0, 0)

    in_specs = [pl.BlockSpec((1, T, Hp), xmap)]
    in_specs += [pl.BlockSpec(tuple(w.shape), wmap) for w in flat]
    out_spec = pl.BlockSpec((1, T, Hp), xmap)

    kernel = functools.partial(
        _layer_kernel, n_heads=n_heads, dp=dp, d_model=d_model,
        sty_dim=sty_dim, half_win=half_win, eps=1e-5)

    # size-aware scoped-VMEM budget: generous over-estimate, clamped to the chip
    w_bytes = sum(int(w.size) * w.dtype.itemsize for w in flat)
    Ap = n_heads * dp
    Fp = packed["w1"].shape[1]
    Tp = T + 2 * half_win
    work = 4 * (3 * T * T + T * 3 * Ap + T * Fp + 6 * Tp * 2 * Hp + 10 * T * Hp)
    est = int(1.5 * (2 * w_bytes + 4 * T * Hp * 2 + work))
    try:
        cap = int(pltpu.get_tpu_info().vmem_capacity_bytes)
    except Exception:
        cap = 64 * 1024 * 1024
    vmem_limit = max(32 * 1024 * 1024, min(est, int(0.75 * cap)))

    return pl.pallas_call(
        kernel,
        out_shape=jax.ShapeDtypeStruct((B, T, Hp), h.dtype),
        grid_spec=pltpu.PrefetchScalarGridSpec(
            num_scalar_prefetch=1,
            grid=(B,),
            in_specs=in_specs,
            out_specs=out_spec,
        ),
        compiler_params=pltpu.CompilerParams(
            dimension_semantics=("parallel",),
            vmem_limit_bytes=vmem_limit,
        ),
    )(lengths, h, *flat)


def prosody_encoder(x, style, x_lengths, params, *, n_heads=2, window_length=17):
    """x: (B, d_model, T), style: (B, sty_dim, T), x_lengths: (B,) int.
    Returns (B, T, d_model + sty_dim) == torch `x.transpose(-1, -2)`."""
    B, D, T = x.shape
    S = style.shape[1]
    H = D + S
    Hp = _round_up(H, 128)
    d_head = H // n_heads
    dp = _round_up(d_head, 128)
    half = window_length // 2

    xt = jnp.transpose(x, (0, 2, 1))               # (B, T, D)
    st = jnp.transpose(style, (0, 2, 1))           # (B, T, S)
    h = jnp.concatenate([xt, st], axis=-1)         # torch.cat([x, style], dim=1)
    if Hp > H:
        h = jnp.concatenate([h, jnp.zeros((B, T, Hp - H), h.dtype)], axis=-1)
    h = h.astype(jnp.bfloat16)                     # inter-layer hidden kept in bf16
    lengths = x_lengths.astype(jnp.int32)

    for lp in params:
        packed = _pack_layer(lp, d_model=D, sty_dim=S, n_heads=n_heads)
        h = _run_layer(lengths, h, packed, n_heads=n_heads, dp=dp,
                       d_model=D, sty_dim=S, half_win=half)

    mask = (jnp.arange(T)[None, :] < lengths[:, None])[..., None]
    return jnp.where(mask, h[:, :, :H].astype(jnp.float32), 0.0)


def make_params(key, n_layers, d_model, sty_dim):
    H = d_model + sty_dim

    def init(k, shape, scale=0.02):
        return scale * jax.random.normal(k, shape, jnp.float32)

    params = []
    for i in range(n_layers):
        keys = jax.random.split(jax.random.fold_in(key, i), 18)
        p = {
            "wq": init(keys[0], (H, H)), "bq": init(keys[1], (1, H)),
            "wk": init(keys[2], (H, H)), "bk": init(keys[3], (1, H)),
            "wv": init(keys[4], (H, H)), "bv": init(keys[5], (1, H)),
            "wo": init(keys[6], (H, H)), "bo": init(keys[7], (1, H)),
            "wg1": init(keys[8], (2, sty_dim, H)), "bg1": init(keys[9], (2, 1, H)),
            "w1": init(keys[10], (H, 2 * H)), "b1": init(keys[11], (1, 2 * H)),
            "w2": init(keys[12], (2 * H, H)), "b2": init(keys[13], (1, H)),
            "wg2": init(keys[14], (2, sty_dim, H)), "bg2": init(keys[15], (2, 1, H)),
            "wp": init(keys[16], (H, d_model)), "bp": init(keys[17], (1, d_model)),
        }
        params.append(p)
    return params


if __name__ == "__main__":
    key = jax.random.PRNGKey(0)
    B, d_model, sty_dim, T = 2, 32, 16, 8
    n_layers, n_heads, window_length = 2, 2, 17

    kx, ks, kp = jax.random.split(key, 3)
    x = jax.random.normal(kx, (B, d_model, T), jnp.float32)        # NCT like torch
    style = jax.random.normal(ks, (B, sty_dim, T), jnp.float32)
    x_lengths = jnp.array([T, 5], jnp.int32)

    params = make_params(kp, n_layers, d_model, sty_dim)

    out = prosody_encoder(x, style, x_lengths, params,
                          n_heads=n_heads, window_length=window_length)
    out = jax.block_until_ready(out)

    assert out.shape == (B, T, d_model + sty_dim), out.shape
    assert bool(jnp.all(jnp.isfinite(out)))
    # positions beyond x_lengths must be zeroed by the final mask
    assert bool(jnp.all(out[1, 5:, :] == 0.0))
    print("KERNEL_OK")
</pallas_src>

<mosaic_0001>
module attributes {stable_mosaic.version = 11 : i64} {
  func.func @_layer_kernel(%arg0: i32, %arg1: memref<2xi32, #tpu.memory_space<smem>>, %arg2: memref<1x8x128xbf16, #tpu.memory_space<vmem>>, %arg3: memref<128x768xbf16, #tpu.memory_space<vmem>>, %arg4: memref<1x768xf32, #tpu.memory_space<vmem>>, %arg5: memref<256x128xbf16, #tpu.memory_space<vmem>>, %arg6: memref<1x128xf32, #tpu.memory_space<vmem>>, %arg7: memref<128x256xbf16, #tpu.memory_space<vmem>>, %arg8: memref<1x256xf32, #tpu.memory_space<vmem>>, %arg9: memref<128x128xbf16, #tpu.memory_space<vmem>>, %arg10: memref<1x128xf32, #tpu.memory_space<vmem>>, %arg11: memref<128x128xbf16, #tpu.memory_space<vmem>>, %arg12: memref<1x128xf32, #tpu.memory_space<vmem>>, %arg13: memref<128x256xbf16, #tpu.memory_space<vmem>>, %arg14: memref<1x256xf32, #tpu.memory_space<vmem>>, %arg15: memref<128x128xbf16, #tpu.memory_space<vmem>>, %arg16: memref<1x128xf32, #tpu.memory_space<vmem>>, %arg17: memref<1x8x128xbf16, #tpu.memory_space<vmem>>) attributes {dimension_semantics = [#tpu.dimension_semantics<parallel>], iteration_bounds = array<i64: 2>, scalar_prefetch = 1 : i64, scratch_operands = 0 : i64, tpu.core_type = #tpu.core_type<tc>, window_params = [{transform_indices = @transform_0, window_bounds = array<i64: 1, 8, 128>}, {pipeline_mode = #tpu.pipeline_mode<synchronous>, transform_indices = @transform_1, window_bounds = array<i64: 128, 768>}, {pipeline_mode = #tpu.pipeline_mode<synchronous>, transform_indices = @transform_2, window_bounds = array<i64: 1, 768>}, {pipeline_mode = #tpu.pipeline_mode<synchronous>, transform_indices = @transform_3, window_bounds = array<i64: 256, 128>}, {pipeline_mode = #tpu.pipeline_mode<synchronous>, transform_indices = @transform_4, window_bounds = array<i64: 1, 128>}, {pipeline_mode = #tpu.pipeline_mode<synchronous>, transform_indices = @transform_5, window_bounds = array<i64: 128, 256>}, {pipeline_mode = #tpu.pipeline_mode<synchronous>, transform_indices = @transform_6, window_bounds = array<i64: 1, 256>}, {pipeline_mode = #tpu.pipeline_mode<synchronous>, transform_indices = @transform_7, window_bounds = array<i64: 128, 128>}, {pipeline_mode = #tpu.pipeline_mode<synchronous>, transform_indices = @transform_8, window_bounds = array<i64: 1, 128>}, {pipeline_mode = #tpu.pipeline_mode<synchronous>, transform_indices = @transform_9, window_bounds = array<i64: 128, 128>}, {pipeline_mode = #tpu.pipeline_mode<synchronous>, transform_indices = @transform_10, window_bounds = array<i64: 1, 128>}, {pipeline_mode = #tpu.pipeline_mode<synchronous>, transform_indices = @transform_11, window_bounds = array<i64: 128, 256>}, {pipeline_mode = #tpu.pipeline_mode<synchronous>, transform_indices = @transform_12, window_bounds = array<i64: 1, 256>}, {pipeline_mode = #tpu.pipeline_mode<synchronous>, transform_indices = @transform_13, window_bounds = array<i64: 128, 128>}, {pipeline_mode = #tpu.pipeline_mode<synchronous>, transform_indices = @transform_14, window_bounds = array<i64: 1, 128>}, {transform_indices = @transform_15, window_bounds = array<i64: 1, 8, 128>}]} {
    %0 = arith.index_cast %arg0 : i32 to index
    %1 = memref.load %arg1[%0] : memref<2xi32, #tpu.memory_space<smem>>
    %c0 = arith.constant 0 : index
    %c0_0 = arith.constant 0 : index
    %c0_1 = arith.constant 0 : index
    %2 = vector.load %arg2[%c0, %c0_0, %c0_1] : memref<1x8x128xbf16, #tpu.memory_space<vmem>>, vector<1x8x128xbf16>
    %3 = vector.shape_cast %2 : vector<1x8x128xbf16> to vector<8x128xbf16>
    %4 = arith.extf %3 : vector<8x128xbf16> to vector<8x128xf32>
    %5 = tpu.iota {dimensions = array<i32: 0>} : vector<8x1xi32>
    %6 = tpu.iota {dimensions = array<i32: 1>} : vector<1x8xi32>
    %7 = vector.broadcast %1 : i32 to vector<8x1xi32>
    %8 = arith.cmpi slt, %5, %7 : vector<8x1xi32>
    %9 = arith.extui %8 : vector<8x1xi1> to vector<8x1xi32>
    %10 = arith.sitofp %9 : vector<8x1xi32> to vector<8x1xf32>
    %11 = vector.broadcast %1 : i32 to vector<1x8xi32>
    %12 = arith.cmpi slt, %6, %11 : vector<1x8xi32>
    %cst = arith.constant 0.000000e+00 : f32
    %cst_2 = arith.constant -1.000000e+04 : f32
    %13 = vector.broadcast %cst : f32 to vector<1x8xf32>
    %14 = vector.broadcast %cst_2 : f32 to vector<1x8xf32>
    %15 = arith.select %12, %13, %14 : vector<1x8xi1>, vector<1x8xf32>
    %16 = vector.broadcast %10 : vector<8x1xf32> to vector<8x128xf32>
    %17 = arith.mulf %4, %16 : vector<8x128xf32>
    %18 = arith.truncf %17 : vector<8x128xf32> to vector<8x128xbf16>
    %c0_3 = arith.constant 0 : index
    %c0_4 = arith.constant 0 : index
    %19 = vector.load %arg3[%c0_3, %c0_4] : memref<128x768xbf16, #tpu.memory_space<vmem>>, vector<128x768xbf16>
    %cst_5 = arith.constant dense<0.000000e+00> : vector<8x768xf32>
    %20 = tpu.matmul %18, %19, %cst_5 {dimension_numbers = #tpu.dot_dimension_numbers<[1], [0], [0], [1], [0, 0, 1, 1], [], []>} : vector<8x128xbf16>, vector<128x768xbf16>, vector<8x768xf32> -> vector<8x768xf32>
    %c0_6 = arith.constant 0 : index
    %c0_7 = arith.constant 0 : index
    %21 = vector.load %arg4[%c0_6, %c0_7] : memref<1x768xf32, #tpu.memory_space<vmem>>, vector<1x768xf32>
    %22 = vector.broadcast %21 : vector<1x768xf32> to vector<8x768xf32>
    %23 = arith.addf %20, %22 : vector<8x768xf32>
    %24 = vector.extract_strided_slice %23 {offsets = [0, 0], sizes = [8, 128], strides = [1, 1]} : vector<8x768xf32> to vector<8x128xf32>
    %25 = vector.extract_strided_slice %23 {offsets = [0, 256], sizes = [8, 128], strides = [1, 1]} : vector<8x768xf32> to vector<8x128xf32>
    %26 = vector.extract_strided_slice %23 {offsets = [0, 512], sizes = [8, 128], strides = [1, 1]} : vector<8x768xf32> to vector<8x128xf32>
    %27 = arith.truncf %24 : vector<8x128xf32> to vector<8x128xbf16>
    %28 = arith.truncf %25 : vector<8x128xf32> to vector<8x128xbf16>
    %cst_8 = arith.constant dense<0.000000e+00> : vector<8x8xf32>
    %29 = tpu.matmul %27, %28, %cst_8 {dimension_numbers = #tpu.dot_dimension_numbers<[1], [1], [0], [0], [0, 0, 1, 0], [], []>} : vector<8x128xbf16>, vector<8x128xbf16>, vector<8x8xf32> -> vector<8x8xf32>
    %30 = vector.broadcast %15 : vector<1x8xf32> to vector<8x8xf32>
    %31 = arith.addf %29, %30 : vector<8x8xf32>
    %cst_9 = arith.constant dense<0xFF800000> : vector<8xf32>
    %32 = vector.multi_reduction <maximumf>, %31, %cst_9 [1] : vector<8x8xf32> to vector<8xf32>
    %cst_10 = arith.constant 0xFF800000 : f32
    %33 = vector.broadcast %cst_10 : f32 to vector<8xf32>
    %34 = arith.maximumf %33, %32 : vector<8xf32>
    %35 = vector.shape_cast %34 : vector<8xf32> to vector<8x1xf32>
    %36 = vector.broadcast %35 : vector<8x1xf32> to vector<8x8xf32>
    %37 = arith.subf %31, %36 : vector<8x8xf32>
    %38 = math.exp %37 : vector<8x8xf32>
    %cst_11 = arith.constant dense<0.000000e+00> : vector<8xf32>
    %39 = vector.multi_reduction <add>, %38, %cst_11 [1] : vector<8x8xf32> to vector<8xf32>
    %40 = vector.shape_cast %39 : vector<8xf32> to vector<8x1xf32>
    %41 = vector.broadcast %40 : vector<8x1xf32> to vector<8x8xf32>
    %42 = arith.divf %38, %41 : vector<8x8xf32>
    %43 = arith.truncf %42 : vector<8x8xf32> to vector<8x8xbf16>
    %44 = arith.truncf %26 : vector<8x128xf32> to vector<8x128xbf16>
    %cst_12 = arith.constant dense<0.000000e+00> : vector<8x128xf32>
    %45 = tpu.matmul %43, %44, %cst_12 {dimension_numbers = #tpu.dot_dimension_numbers<[1], [0], [0], [1], [0, 0, 1, 1], [], []>} : vector<8x8xbf16>, vector<8x128xbf16>, vector<8x128xf32> -> vector<8x128xf32>
    %46 = vector.extract_strided_slice %23 {offsets = [0, 128], sizes = [8, 128], strides = [1, 1]} : vector<8x768xf32> to vector<8x128xf32>
    %47 = vector.extract_strided_slice %23 {offsets = [0, 384], sizes = [8, 128], strides = [1, 1]} : vector<8x768xf32> to vector<8x128xf32>
    %48 = vector.extract_strided_slice %23 {offsets = [0, 640], sizes = [8, 128], strides = [1, 1]} : vector<8x768xf32> to vector<8x128xf32>
    %49 = arith.truncf %46 : vector<8x128xf32> to vector<8x128xbf16>
    %50 = arith.truncf %47 : vector<8x128xf32> to vector<8x128xbf16>
    %cst_13 = arith.constant dense<0.000000e+00> : vector<8x8xf32>
    %51 = tpu.matmul %49, %50, %cst_13 {dimension_numbers = #tpu.dot_dimension_numbers<[1], [1], [0], [0], [0, 0, 1, 0], [], []>} : vector<8x128xbf16>, vector<8x128xbf16>, vector<8x8xf32> -> vector<8x8xf32>
    %52 = vector.broadcast %15 : vector<1x8xf32> to vector<8x8xf32>
    %53 = arith.addf %51, %52 : vector<8x8xf32>
    %cst_14 = arith.constant dense<0xFF800000> : vector<8xf32>
    %54 = vector.multi_reduction <maximumf>, %53, %cst_14 [1] : vector<8x8xf32> to vector<8xf32>
    %cst_15 = arith.constant 0xFF800000 : f32
    %55 = vector.broadcast %cst_15 : f32 to vector<8xf32>
    %56 = arith.maximumf %55, %54 : vector<8xf32>
    %57 = vector.shape_cast %56 : vector<8xf32> to vector<8x1xf32>
    %58 = vector.broadcast %57 : vector<8x1xf32> to vector<8x8xf32>
    %59 = arith.subf %53, %58 : vector<8x8xf32>
    %60 = math.exp %59 : vector<8x8xf32>
    %cst_16 = arith.constant dense<0.000000e+00> : vector<8xf32>
    %61 = vector.multi_reduction <add>, %60, %cst_16 [1] : vector<8x8xf32> to vector<8xf32>
    %62 = vector.shape_cast %61 : vector<8xf32> to vector<8x1xf32>
    %63 = vector.broadcast %62 : vector<8x1xf32> to vector<8x8xf32>
    %64 = arith.divf %60, %63 : vector<8x8xf32>
    %65 = arith.truncf %64 : vector<8x8xf32> to vector<8x8xbf16>
    %66 = arith.truncf %48 : vector<8x128xf32> to vector<8x128xbf16>
    %cst_17 = arith.constant dense<0.000000e+00> : vector<8x128xf32>
    %67 = tpu.matmul %65, %66, %cst_17 {dimension_numbers = #tpu.dot_dimension_numbers<[1], [0], [0], [1], [0, 0, 1, 1], [], []>} : vector<8x8xbf16>, vector<8x128xbf16>, vector<8x128xf32> -> vector<8x128xf32>
    %68 = tpu.concatenate %45, %67 in 1 : vector<8x128xf32>, vector<8x128xf32> -> vector<8x256xf32>
    %69 = arith.truncf %68 : vector<8x256xf32> to vector<8x256xbf16>
    %c0_18 = arith.constant 0 : index
    %c0_19 = arith.constant 0 : index
    %70 = vector.load %arg5[%c0_18, %c0_19] : memref<256x128xbf16, #tpu.memory_space<vmem>>, vector<256x128xbf16>
    %cst_20 = arith.constant dense<0.000000e+00> : vector<8x128xf32>
    %71 = tpu.matmul %69, %70, %cst_20 {dimension_numbers = #tpu.dot_dimension_numbers<[1], [0], [0], [1], [0, 0, 1, 1], [], []>} : vector<8x256xbf16>, vector<256x128xbf16>, vector<8x128xf32> -> vector<8x128xf32>
    %c0_21 = arith.constant 0 : index
    %c0_22 = arith.constant 0 : index
    %72 = vector.load %arg6[%c0_21, %c0_22] : memref<1x128xf32, #tpu.memory_space<vmem>>, vector<1x128xf32>
    %73 = vector.broadcast %72 : vector<1x128xf32> to vector<8x128xf32>
    %74 = arith.addf %71, %73 : vector<8x128xf32>
    %c8_i32 = arith.constant 8 : i32
    %75 = vector.broadcast %c8_i32 : i32 to vector<8x1xi32>
    %76 = arith.addi %5, %75 : vector<8x1xi32>
    %c7_i32 = arith.constant 7 : i32
    %77 = vector.broadcast %c7_i32 : i32 to vector<8x1xi32>
    %78 = arith.minsi %76, %77 : vector<8x1xi32>
    %c1_i32 = arith.constant 1 : i32
    %79 = arith.subi %1, %c1_i32 : i32
    %80 = vector.broadcast %79 : i32 to vector<8x1xi32>
    %81 = arith.minsi %78, %80 : vector<8x1xi32>
    %c8_i32_23 = arith.constant 8 : i32
    %82 = vector.broadcast %c8_i32_23 : i32 to vector<8x1xi32>
    %83 = arith.subi %5, %82 : vector<8x1xi32>
    %c0_i32 = arith.constant 0 : i32
    %84 = vector.broadcast %c0_i32 : i32 to vector<8x1xi32>
    %85 = arith.maxsi %83, %84 : vector<8x1xi32>
    %86 = arith.subi %81, %85 : vector<8x1xi32>
    %c1_i32_24 = arith.constant 1 : i32
    %87 = vector.broadcast %c1_i32_24 : i32 to vector<8x1xi32>
    %88 = arith.addi %86, %87 : vector<8x1xi32>
    %89 = arith.sitofp %88 : vector<8x1xi32> to vector<8x1xf32>
    %cst_25 = arith.constant 1.000000e+00 : f32
    %90 = vector.broadcast %cst_25 : f32 to vector<8x1xf32>
    %91 = arith.maximumf %89, %90 : vector<8x1xf32>
    %92 = tpu.reciprocal %91 {approx = true} : vector<8x1xf32> -> vector<8x1xf32>
    %c1_i32_26 = arith.constant 1 : i32
    %93 = arith.maxsi %1, %c1_i32_26 : i32
    %94 = arith.sitofp %93 : i32 to f32
    %cst_27 = arith.constant 1.000000e+00 : f32
    %95 = arith.divf %cst_27, %94 : f32
    %96 = arith.addf %17, %74 : vector<8x128xf32>
    %97 = vector.broadcast %10 : vector<8x1xf32> to vector<8x128xf32>
    %98 = arith.mulf %96, %97 : vector<8x128xf32>
    %cst_28 = arith.constant dense<0.000000e+00> : vector<128xf32>
    %99 = vector.multi_reduction <add>, %98, %cst_28 [0] : vector<8x128xf32> to vector<128xf32>
    %100 = vector.shape_cast %99 : vector<128xf32> to vector<1x128xf32>
    %101 = vector.broadcast %95 : f32 to vector<1x128xf32>
    %102 = arith.mulf %100, %101 : vector<1x128xf32>
    %103 = vector.broadcast %102 : vector<1x128xf32> to vector<8x128xf32>
    %104 = arith.subf %96, %103 : vector<8x128xf32>
    %105 = vector.broadcast %10 : vector<8x1xf32> to vector<8x128xf32>
    %106 = arith.mulf %104, %105 : vector<8x128xf32>
    %107 = arith.mulf %106, %106 : vector<8x128xf32>
    %108 = tpu.concatenate %106, %107 in 1 : vector<8x128xf32>, vector<8x128xf32> -> vector<8x256xf32>
    %cst_29 = arith.constant 0.000000e+00 : f32
    %109 = vector.broadcast %cst_29 : f32 to vector<8x256xf32>
    %110 = tpu.concatenate %109, %108, %109 in 0 : vector<8x256xf32>, vector<8x256xf32>, vector<8x256xf32> -> vector<24x256xf32>
    %111 = vector.extract_strided_slice %110 {offsets = [1, 0], sizes = [23, 256], strides = [1, 1]} : vector<24x256xf32> to vector<23x256xf32>
    %cst_30 = arith.constant 0.000000e+00 : f32
    %112 = vector.broadcast %cst_30 : f32 to vector<1x256xf32>
    %113 = tpu.concatenate %111, %112 in 0 : vector<23x256xf32>, vector<1x256xf32> -> vector<24x256xf32>
    %114 = arith.addf %110, %113 : vector<24x256xf32>
    %115 = vector.extract_strided_slice %114 {offsets = [2, 0], sizes = [22, 256], strides = [1, 1]} : vector<24x256xf32> to vector<22x256xf32>
    %cst_31 = arith.constant 0.000000e+00 : f32
    %116 = vector.broadcast %cst_31 : f32 to vector<2x256xf32>
    %117 = tpu.concatenate %115, %116 in 0 : vector<22x256xf32>, vector<2x256xf32> -> vector<24x256xf32>
    %118 = arith.addf %114, %117 : vector<24x256xf32>
    %119 = vector.extract_strided_slice %118 {offsets = [4, 0], sizes = [20, 256], strides = [1, 1]} : vector<24x256xf32> to vector<20x256xf32>
    %cst_32 = arith.constant 0.000000e+00 : f32
    %120 = vector.broadcast %cst_32 : f32 to vector<4x256xf32>
    %121 = tpu.concatenate %119, %120 in 0 : vector<20x256xf32>, vector<4x256xf32> -> vector<24x256xf32>
    %122 = arith.addf %118, %121 : vector<24x256xf32>
    %123 = vector.extract_strided_slice %122 {offsets = [8, 0], sizes = [16, 256], strides = [1, 1]} : vector<24x256xf32> to vector<16x256xf32>
    %cst_33 = arith.constant 0.000000e+00 : f32
    %124 = vector.broadcast %cst_33 : f32 to vector<8x256xf32>
    %125 = tpu.concatenate %123, %124 in 0 : vector<16x256xf32>, vector<8x256xf32> -> vector<24x256xf32>
    %126 = arith.addf %122, %125 : vector<24x256xf32>
    %127 = vector.extract_strided_slice %110 {offsets = [16, 0], sizes = [8, 256], strides = [1, 1]} : vector<24x256xf32> to vector<8x256xf32>
    %cst_34 = arith.constant 0.000000e+00 : f32
    %128 = vector.broadcast %cst_34 : f32 to vector<16x256xf32>
    %129 = tpu.concatenate %127, %128 in 0 : vector<8x256xf32>, vector<16x256xf32> -> vector<24x256xf32>
    %130 = arith.addf %126, %129 : vector<24x256xf32>
    %131 = vector.extract_strided_slice %130 {offsets = [0, 0], sizes = [8, 256], strides = [1, 1]} : vector<24x256xf32> to vector<8x256xf32>
    %132 = vector.extract_strided_slice %131 {offsets = [0, 0], sizes = [8, 128], strides = [1, 1]} : vector<8x256xf32> to vector<8x128xf32>
    %133 = vector.broadcast %92 : vector<8x1xf32> to vector<8x128xf32>
    %134 = arith.mulf %132, %133 : vector<8x128xf32>
    %135 = vector.extract_strided_slice %131 {offsets = [0, 128], sizes = [8, 128], strides = [1, 1]} : vector<8x256xf32> to vector<8x128xf32>
    %136 = vector.broadcast %92 : vector<8x1xf32> to vector<8x128xf32>
    %137 = arith.mulf %135, %136 : vector<8x128xf32>
    %138 = arith.mulf %134, %134 : vector<8x128xf32>
    %139 = arith.subf %137, %138 : vector<8x128xf32>
    %cst_35 = arith.constant 0.000000e+00 : f32
    %140 = vector.broadcast %cst_35 : f32 to vector<8x128xf32>
    %141 = arith.maximumf %139, %140 : vector<8x128xf32>
    %142 = vector.broadcast %102 : vector<1x128xf32> to vector<8x128xf32>
    %143 = arith.subf %96, %142 : vector<8x128xf32>
    %144 = arith.subf %143, %134 : vector<8x128xf32>
    %cst_36 = arith.constant 9.99999974E-6 : f32
    %145 = vector.broadcast %cst_36 : f32 to vector<8x128xf32>
    %146 = arith.addf %141, %145 : vector<8x128xf32>
    %147 = math.rsqrt %146 : vector<8x128xf32>
    %148 = arith.mulf %144, %147 : vector<8x128xf32>
    %149 = arith.truncf %4 : vector<8x128xf32> to vector<8x128xbf16>
    %c0_37 = arith.constant 0 : index
    %c0_38 = arith.constant 0 : index
    %150 = vector.load %arg7[%c0_37, %c0_38] : memref<128x256xbf16, #tpu.memory_space<vmem>>, vector<128x256xbf16>
    %cst_39 = arith.constant dense<0.000000e+00> : vector<8x256xf32>
    %151 = tpu.matmul %149, %150, %cst_39 {dimension_numbers = #tpu.dot_dimension_numbers<[1], [0], [0], [1], [0, 0, 1, 1], [], []>} : vector<8x128xbf16>, vector<128x256xbf16>, vector<8x256xf32> -> vector<8x256xf32>
    %c0_40 = arith.constant 0 : index
    %c0_41 = arith.constant 0 : index
    %152 = vector.load %arg8[%c0_40, %c0_41] : memref<1x256xf32, #tpu.memory_space<vmem>>, vector<1x256xf32>
    %153 = vector.broadcast %152 : vector<1x256xf32> to vector<8x256xf32>
    %154 = arith.addf %151, %153 : vector<8x256xf32>
    %155 = vector.extract_strided_slice %154 {offsets = [0, 0], sizes = [8, 128], strides = [1, 1]} : vector<8x256xf32> to vector<8x128xf32>
    %156 = vector.extract_strided_slice %154 {offsets = [0, 128], sizes = [8, 128], strides = [1, 1]} : vector<8x256xf32> to vector<8x128xf32>
    %cst_42 = arith.constant 1.000000e+00 : f32
    %157 = vector.broadcast %cst_42 : f32 to vector<8x128xf32>
    %158 = arith.addf %157, %155 : vector<8x128xf32>
    %159 = arith.mulf %158, %148 : vector<8x128xf32>
    %160 = arith.addf %159, %156 : vector<8x128xf32>
    %161 = vector.broadcast %10 : vector<8x1xf32> to vector<8x128xf32>
    %162 = arith.mulf %160, %161 : vector<8x128xf32>
    %163 = arith.truncf %162 : vector<8x128xf32> to vector<8x128xbf16>
    %c0_43 = arith.constant 0 : index
    %c0_44 = arith.constant 0 : index
    %164 = vector.load %arg9[%c0_43, %c0_44] : memref<128x128xbf16, #tpu.memory_space<vmem>>, vector<128x128xbf16>
    %cst_45 = arith.constant dense<0.000000e+00> : vector<8x128xf32>
    %165 = tpu.matmul %163, %164, %cst_45 {dimension_numbers = #tpu.dot_dimension_numbers<[1], [0], [0], [1], [0, 0, 1, 1], [], []>} : vector<8x128xbf16>, vector<128x128xbf16>, vector<8x128xf32> -> vector<8x128xf32>
    %c0_46 = arith.constant 0 : index
    %c0_47 = arith.constant 0 : index
    %166 = vector.load %arg10[%c0_46, %c0_47] : memref<1x128xf32, #tpu.memory_space<vmem>>, vector<1x128xf32>
    %167 = vector.broadcast %166 : vector<1x128xf32> to vector<8x128xf32>
    %168 = arith.addf %165, %167 : vector<8x128xf32>
    %cst_48 = arith.constant 0.000000e+00 : f32
    %169 = vector.broadcast %cst_48 : f32 to vector<8x128xf32>
    %170 = arith.maximumf %168, %169 : vector<8x128xf32>
    %171 = vector.broadcast %10 : vector<8x1xf32> to vector<8x128xf32>
    %172 = arith.mulf %170, %171 : vector<8x128xf32>
    %173 = arith.truncf %172 : vector<8x128xf32> to vector<8x128xbf16>
    %c0_49 = arith.constant 0 : index
    %c0_50 = arith.constant 0 : index
    %174 = vector.load %arg11[%c0_49, %c0_50] : memref<128x128xbf16, #tpu.memory_space<vmem>>, vector<128x128xbf16>
    %cst_51 = arith.constant dense<0.000000e+00> : vector<8x128xf32>
    %175 = tpu.matmul %173, %174, %cst_51 {dimension_numbers = #tpu.dot_dimension_numbers<[1], [0], [0], [1], [0, 0, 1, 1], [], []>} : vector<8x128xbf16>, vector<128x128xbf16>, vector<8x128xf32> -> vector<8x128xf32>
    %c0_52 = arith.constant 0 : index
    %c0_53 = arith.constant 0 : index
    %176 = vector.load %arg12[%c0_52, %c0_53] : memref<1x128xf32, #tpu.memory_space<vmem>>, vector<1x128xf32>
    %177 = vector.broadcast %176 : vector<1x128xf32> to vector<8x128xf32>
    %178 = arith.addf %175, %177 : vector<8x128xf32>
    %179 = vector.broadcast %10 : vector<8x1xf32> to vector<8x128xf32>
    %180 = arith.mulf %178, %179 : vector<8x128xf32>
    %181 = arith.addf %160, %180 : vector<8x128xf32>
    %182 = vector.broadcast %10 : vector<8x1xf32> to vector<8x128xf32>
    %183 = arith.mulf %181, %182 : vector<8x128xf32>
    %cst_54 = arith.constant dense<0.000000e+00> : vector<128xf32>
    %184 = vector.multi_reduction <add>, %183, %cst_54 [0] : vector<8x128xf32> to vector<128xf32>
    %185 = vector.shape_cast %184 : vector<128xf32> to vector<1x128xf32>
    %186 = vector.broadcast %95 : f32 to vector<1x128xf32>
    %187 = arith.mulf %185, %186 : vector<1x128xf32>
    %188 = vector.broadcast %187 : vector<1x128xf32> to vector<8x128xf32>
    %189 = arith.subf %181, %188 : vector<8x128xf32>
    %190 = vector.broadcast %10 : vector<8x1xf32> to vector<8x128xf32>
    %191 = arith.mulf %189, %190 : vector<8x128xf32>
    %192 = arith.mulf %191, %191 : vector<8x128xf32>
    %193 = tpu.concatenate %191, %192 in 1 : vector<8x128xf32>, vector<8x128xf32> -> vector<8x256xf32>
    %cst_55 = arith.constant 0.000000e+00 : f32
    %194 = vector.broadcast %cst_55 : f32 to vector<8x256xf32>
    %195 = tpu.concatenate %194, %193, %194 in 0 : vector<8x256xf32>, vector<8x256xf32>, vector<8x256xf32> -> vector<24x256xf32>
    %196 = vector.extract_strided_slice %195 {offsets = [1, 0], sizes = [23, 256], strides = [1, 1]} : vector<24x256xf32> to vector<23x256xf32>
    %cst_56 = arith.constant 0.000000e+00 : f32
    %197 = vector.broadcast %cst_56 : f32 to vector<1x256xf32>
    %198 = tpu.concatenate %196, %197 in 0 : vector<23x256xf32>, vector<1x256xf32> -> vector<24x256xf32>
    %199 = arith.addf %195, %198 : vector<24x256xf32>
    %200 = vector.extract_strided_slice %199 {offsets = [2, 0], sizes = [22, 256], strides = [1, 1]} : vector<24x256xf32> to vector<22x256xf32>
    %cst_57 = arith.constant 0.000000e+00 : f32
    %201 = vector.broadcast %cst_57 : f32 to vector<2x256xf32>
    %202 = tpu.concatenate %200, %201 in 0 : vector<22x256xf32>, vector<2x256xf32> -> vector<24x256xf32>
    %203 = arith.addf %199, %202 : vector<24x256xf32>
    %204 = vector.extract_strided_slice %203 {offsets = [4, 0], sizes = [20, 256], strides = [1, 1]} : vector<24x256xf32> to vector<20x256xf32>
    %cst_58 = arith.constant 0.000000e+00 : f32
    %205 = vector.broadcast %cst_58 : f32 to vector<4x256xf32>
    %206 = tpu.concatenate %204, %205 in 0 : vector<20x256xf32>, vector<4x256xf32> -> vector<24x256xf32>
    %207 = arith.addf %203, %206 : vector<24x256xf32>
    %208 = vector.extract_strided_slice %207 {offsets = [8, 0], sizes = [16, 256], strides = [1, 1]} : vector<24x256xf32> to vector<16x256xf32>
    %cst_59 = arith.constant 0.000000e+00 : f32
    %209 = vector.broadcast %cst_59 : f32 to vector<8x256xf32>
    %210 = tpu.concatenate %208, %209 in 0 : vector<16x256xf32>, vector<8x256xf32> -> vector<24x256xf32>
    %211 = arith.addf %207, %210 : vector<24x256xf32>
    %212 = vector.extract_strided_slice %195 {offsets = [16, 0], sizes = [8, 256], strides = [1, 1]} : vector<24x256xf32> to vector<8x256xf32>
    %cst_60 = arith.constant 0.000000e+00 : f32
    %213 = vector.broadcast %cst_60 : f32 to vector<16x256xf32>
    %214 = tpu.concatenate %212, %213 in 0 : vector<8x256xf32>, vector<16x256xf32> -> vector<24x256xf32>
    %215 = arith.addf %211, %214 : vector<24x256xf32>
    %216 = vector.extract_strided_slice %215 {offsets = [0, 0], sizes = [8, 256], strides = [1, 1]} : vector<24x256xf32> to vector<8x256xf32>
    %217 = vector.extract_strided_slice %216 {offsets = [0, 0], sizes = [8, 128], strides = [1, 1]} : vector<8x256xf32> to vector<8x128xf32>
    %218 = vector.broadcast %92 : vector<8x1xf32> to vector<8x128xf32>
    %219 = arith.mulf %217, %218 : vector<8x128xf32>
    %220 = vector.extract_strided_slice %216 {offsets = [0, 128], sizes = [8, 128], strides = [1, 1]} : vector<8x256xf32> to vector<8x128xf32>
    %221 = vector.broadcast %92 : vector<8x1xf32> to vector<8x128xf32>
    %222 = arith.mulf %220, %221 : vector<8x128xf32>
    %223 = arith.mulf %219, %219 : vector<8x128xf32>
    %224 = arith.subf %222, %223 : vector<8x128xf32>
    %cst_61 = arith.constant 0.000000e+00 : f32
    %225 = vector.broadcast %cst_61 : f32 to vector<8x128xf32>
    %226 = arith.maximumf %224, %225 : vector<8x128xf32>
    %227 = vector.broadcast %187 : vector<1x128xf32> to vector<8x128xf32>
    %228 = arith.subf %181, %227 : vector<8x128xf32>
    %229 = arith.subf %228, %219 : vector<8x128xf32>
    %cst_62 = arith.constant 9.99999974E-6 : f32
    %230 = vector.broadcast %cst_62 : f32 to vector<8x128xf32>
    %231 = arith.addf %226, %230 : vector<8x128xf32>
    %232 = math.rsqrt %231 : vector<8x128xf32>
    %233 = arith.mulf %229, %232 : vector<8x128xf32>
    %234 = arith.truncf %4 : vector<8x128xf32> to vector<8x128xbf16>
    %c0_63 = arith.constant 0 : index
    %c0_64 = arith.constant 0 : index
    %235 = vector.load %arg13[%c0_63, %c0_64] : memref<128x256xbf16, #tpu.memory_space<vmem>>, vector<128x256xbf16>
    %cst_65 = arith.constant dense<0.000000e+00> : vector<8x256xf32>
    %236 = tpu.matmul %234, %235, %cst_65 {dimension_numbers = #tpu.dot_dimension_numbers<[1], [0], [0], [1], [0, 0, 1, 1], [], []>} : vector<8x128xbf16>, vector<128x256xbf16>, vector<8x256xf32> -> vector<8x256xf32>
    %c0_66 = arith.constant 0 : index
    %c0_67 = arith.constant 0 : index
    %237 = vector.load %arg14[%c0_66, %c0_67] : memref<1x256xf32, #tpu.memory_space<vmem>>, vector<1x256xf32>
    %238 = vector.broadcast %237 : vector<1x256xf32> to vector<8x256xf32>
    %239 = arith.addf %236, %238 : vector<8x256xf32>
    %240 = vector.extract_strided_slice %239 {offsets = [0, 0], sizes = [8, 128], strides = [1, 1]} : vector<8x256xf32> to vector<8x128xf32>
    %241 = vector.extract_strided_slice %239 {offsets = [0, 128], sizes = [8, 128], strides = [1, 1]} : vector<8x256xf32> to vector<8x128xf32>
    %cst_68 = arith.constant 1.000000e+00 : f32
    %242 = vector.broadcast %cst_68 : f32 to vector<8x128xf32>
    %243 = arith.addf %242, %240 : vector<8x128xf32>
    %244 = arith.mulf %243, %233 : vector<8x128xf32>
    %245 = arith.addf %244, %241 : vector<8x128xf32>
    %246 = arith.truncf %245 : vector<8x128xf32> to vector<8x128xbf16>
    %c0_69 = arith.constant 0 : index
    %c0_70 = arith.constant 0 : index
    %247 = vector.load %arg15[%c0_69, %c0_70] : memref<128x128xbf16, #tpu.memory_space<vmem>>, vector<128x128xbf16>
    %cst_71 = arith.constant dense<0.000000e+00> : vector<8x128xf32>
    %248 = tpu.matmul %246, %247, %cst_71 {dimension_numbers = #tpu.dot_dimension_numbers<[1], [0], [0], [1], [0, 0, 1, 1], [], []>} : vector<8x128xbf16>, vector<128x128xbf16>, vector<8x128xf32> -> vector<8x128xf32>
    %c0_72 = arith.constant 0 : index
    %c0_73 = arith.constant 0 : index
    %249 = vector.load %arg16[%c0_72, %c0_73] : memref<1x128xf32, #tpu.memory_space<vmem>>, vector<1x128xf32>
    %250 = vector.broadcast %249 : vector<1x128xf32> to vector<8x128xf32>
    %251 = arith.addf %248, %250 : vector<8x128xf32>
    %252 = tpu.iota {dimensions = array<i32: 1>} : vector<1x128xi32>
    %c32_i32 = arith.constant 32 : i32
    %253 = vector.broadcast %c32_i32 : i32 to vector<1x128xi32>
    %254 = arith.cmpi sge, %252, %253 : vector<1x128xi32>
    %c48_i32 = arith.constant 48 : i32
    %255 = vector.broadcast %c48_i32 : i32 to vector<1x128xi32>
    %256 = arith.cmpi slt, %252, %255 : vector<1x128xi32>
    %257 = arith.andi %254, %256 : vector<1x128xi1>
    %258 = arith.extui %257 : vector<1x128xi1> to vector<1x128xi32>
    %259 = arith.sitofp %258 : vector<1x128xi32> to vector<1x128xf32>
    %260 = vector.broadcast %259 : vector<1x128xf32> to vector<8x128xf32>
    %261 = arith.mulf %4, %260 : vector<8x128xf32>
    %262 = arith.addf %251, %261 : vector<8x128xf32>
    %263 = arith.truncf %262 : vector<8x128xf32> to vector<8x128xbf16>
    %c0_74 = arith.constant 0 : index
    %c0_75 = arith.constant 0 : index
    %c0_76 = arith.constant 0 : index
    %264 = vector.load %arg17[%c0_74, %c0_75, %c0_76] : memref<1x8x128xbf16, #tpu.memory_space<vmem>>, vector<1x8x128xbf16>
    %265 = vector.shape_cast %264 : vector<1x8x128xbf16> to vector<8x128xbf16>
    %266 = vector.shape_cast %263 : vector<8x128xbf16> to vector<1x8x128xbf16>
    tpu.vector_store %arg17[%c0_74, %c0_75, %c0_76], %266 {strides = array<i32>} : memref<1x8x128xbf16, #tpu.memory_space<vmem>>, vector<1x8x128xbf16>,
    return
  }
  func.func @transform_0(%arg0: i32, %arg1: memref<2xi32, #tpu.memory_space<smem>>) -> (i32, i32, i32) {
    %c0_i32 = arith.constant 0 : i32
    %c0_i32_0 = arith.constant 0 : i32
    %c0_i32_1 = arith.constant 0 : i32
    return %arg0, %c0_i32, %c0_i32_0 : i32, i32, i32
  }
  func.func @transform_1(%arg0: i32, %arg1: memref<2xi32, #tpu.memory_space<smem>>) -> (i32, i32) {
    %c0_i32 = arith.constant 0 : i32
    %c0_i32_0 = arith.constant 0 : i32
    %c0_i32_1 = arith.constant 0 : i32
    return %c0_i32, %c0_i32_0 : i32, i32
  }
  func.func @transform_2(%arg0: i32, %arg1: memref<2xi32, #tpu.memory_space<smem>>) -> (i32, i32) {
    %c0_i32 = arith.constant 0 : i32
    %c0_i32_0 = arith.constant 0 : i32
    %c0_i32_1 = arith.constant 0 : i32
    return %c0_i32, %c0_i32_0 : i32, i32
  }
  func.func @transform_3(%arg0: i32, %arg1: memref<2xi32, #tpu.memory_space<smem>>) -> (i32, i32) {
    %c0_i32 = arith.constant 0 : i32
    %c0_i32_0 = arith.constant 0 : i32
    %c0_i32_1 = arith.constant 0 : i32
    return %c0_i32, %c0_i32_0 : i32, i32
  }
  func.func @transform_4(%arg0: i32, %arg1: memref<2xi32, #tpu.memory_space<smem>>) -> (i32, i32) {
    %c0_i32 = arith.constant 0 : i32
    %c0_i32_0 = arith.constant 0 : i32
    %c0_i32_1 = arith.constant 0 : i32
    return %c0_i32, %c0_i32_0 : i32, i32
  }
  func.func @transform_5(%arg0: i32, %arg1: memref<2xi32, #tpu.memory_space<smem>>) -> (i32, i32) {
    %c0_i32 = arith.constant 0 : i32
    %c0_i32_0 = arith.constant 0 : i32
    %c0_i32_1 = arith.constant 0 : i32
    return %c0_i32, %c0_i32_0 : i32, i32
  }
  func.func @transform_6(%arg0: i32, %arg1: memref<2xi32, #tpu.memory_space<smem>>) -> (i32, i32) {
    %c0_i32 = arith.constant 0 : i32
    %c0_i32_0 = arith.constant 0 : i32
    %c0_i32_1 = arith.constant 0 : i32
    return %c0_i32, %c0_i32_0 : i32, i32
  }
  func.func @transform_7(%arg0: i32, %arg1: memref<2xi32, #tpu.memory_space<smem>>) -> (i32, i32) {
    %c0_i32 = arith.constant 0 : i32
    %c0_i32_0 = arith.constant 0 : i32
    %c0_i32_1 = arith.constant 0 : i32
    return %c0_i32, %c0_i32_0 : i32, i32
  }
  func.func @transform_8(%arg0: i32, %arg1: memref<2xi32, #tpu.memory_space<smem>>) -> (i32, i32) {
    %c0_i32 = arith.constant 0 : i32
    %c0_i32_0 = arith.constant 0 : i32
    %c0_i32_1 = arith.constant 0 : i32
    return %c0_i32, %c0_i32_0 : i32, i32
  }
  func.func @transform_9(%arg0: i32, %arg1: memref<2xi32, #tpu.memory_space<smem>>) -> (i32, i32) {
    %c0_i32 = arith.constant 0 : i32
    %c0_i32_0 = arith.constant 0 : i32
    %c0_i32_1 = arith.constant 0 : i32
    return %c0_i32, %c0_i32_0 : i32, i32
  }
  func.func @transform_10(%arg0: i32, %arg1: memref<2xi32, #tpu.memory_space<smem>>) -> (i32, i32) {
    %c0_i32 = arith.constant 0 : i32
    %c0_i32_0 = arith.constant 0 : i32
    %c0_i32_1 = arith.constant 0 : i32
    return %c0_i32, %c0_i32_0 : i32, i32
  }
  func.func @transform_11(%arg0: i32, %arg1: memref<2xi32, #tpu.memory_space<smem>>) -> (i32, i32) {
    %c0_i32 = arith.constant 0 : i32
    %c0_i32_0 = arith.constant 0 : i32
    %c0_i32_1 = arith.constant 0 : i32
    return %c0_i32, %c0_i32_0 : i32, i32
  }
  func.func @transform_12(%arg0: i32, %arg1: memref<2xi32, #tpu.memory_space<smem>>) -> (i32, i32) {
    %c0_i32 = arith.constant 0 : i32
    %c0_i32_0 = arith.constant 0 : i32
    %c0_i32_1 = arith.constant 0 : i32
    return %c0_i32, %c0_i32_0 : i32, i32
  }
  func.func @transform_13(%arg0: i32, %arg1: memref<2xi32, #tpu.memory_space<smem>>) -> (i32, i32) {
    %c0_i32 = arith.constant 0 : i32
    %c0_i32_0 = arith.constant 0 : i32
    %c0_i32_1 = arith.constant 0 : i32
    return %c0_i32, %c0_i32_0 : i32, i32
  }
  func.func @transform_14(%arg0: i32, %arg1: memref<2xi32, #tpu.memory_space<smem>>) -> (i32, i32) {
    %c0_i32 = arith.constant 0 : i32
    %c0_i32_0 = arith.constant 0 : i32
    %c0_i32_1 = arith.constant 0 : i32
    return %c0_i32, %c0_i32_0 : i32, i32
  }
  func.func @transform_15(%arg0: i32, %arg1: memref<2xi32, #tpu.memory_space<smem>>) -> (i32, i32, i32) {
    %c0_i32 = arith.constant 0 : i32
    %c0_i32_0 = arith.constant 0 : i32
    %c0_i32_1 = arith.constant 0 : i32
    return %arg0, %c0_i32, %c0_i32_0 : i32, i32, i32
  }
}

</mosaic_0001>

<llo_original>
// kernel: tpu_custom_call.1
$region0: #{tpu_custom_call.1}
  #allocation0 [shape = 'u32[]', space=smem, size = 0x4, offset = 0x4, fixed_abs, tag = 'smem constant byte address 0x4 - core index']
  #allocation1 [shape = 'u32[144,128]{1,0:T(1,128)}', space=vmem, size = 0x12000, scoped, tag = 'internal scratch']
  #allocation2 [shape = 's32[1]{0}', space=sflag, size = 0x4, scoped, tag = 'scoped memory for tpu_custom_call.1']
  #allocation3 [shape = 'u8[512]{0}', space=smem, size = 0x200, scoped, tag = 'prefetched SMEM operand 0']
  %s0 = inlined_call_operand.hbm [shape: s32[2], index: 0, kind: input, shape index: {}]
  %s1 = inlined_call_operand.hbm [shape: bf16[2,8,128], index: 1, kind: input, shape index: {}]
  %s2 = inlined_call_operand.hbm [shape: bf16[128,768], index: 2, kind: input, shape index: {}]
  %s3 = inlined_call_operand.vmem [shape: f32[1,768], index: 3, kind: input, shape index: {}]
  %s4 = inlined_call_operand.hbm [shape: bf16[256,128], index: 4, kind: input, shape index: {}]
  %s5 = inlined_call_operand.vmem [shape: f32[1,128], index: 5, kind: input, shape index: {}]
  %s6 = inlined_call_operand.hbm [shape: bf16[128,256], index: 6, kind: input, shape index: {}]
  %s7 = inlined_call_operand.vmem [shape: f32[1,256], index: 7, kind: input, shape index: {}]
  %s8 = inlined_call_operand.hbm [shape: bf16[128,128], index: 8, kind: input, shape index: {}]
  %s9 = inlined_call_operand.vmem [shape: f32[1,128], index: 9, kind: input, shape index: {}]
  %s10 = inlined_call_operand.hbm [shape: bf16[128,128], index: 10, kind: input, shape index: {}]
  %s11 = inlined_call_operand.vmem [shape: f32[1,128], index: 11, kind: input, shape index: {}]
  %s12 = inlined_call_operand.hbm [shape: bf16[128,256], index: 12, kind: input, shape index: {}]
  %s13 = inlined_call_operand.vmem [shape: f32[1,256], index: 13, kind: input, shape index: {}]
  %s14 = inlined_call_operand.hbm [shape: bf16[128,128], index: 14, kind: input, shape index: {}]
  %s15 = inlined_call_operand.vmem [shape: f32[1,128], index: 15, kind: input, shape index: {}]
  %s16 = inlined_call_operand.hbm [shape: bf16[2,8,128], index: 16, kind: output, shape index: {}]
  %s17 = sld [smem:[#allocation0]]
  $region125: #{tpu_custom_call.1} parent=0
    _
  %s19 = ssub.s32 1, %s17
  %s20 = scalar_select 0, %s19, %s17
  %22 = dma.hbm_to_smem %s0, 16, [#allocation3], [#allocation2]
  %23 = dma.done [#allocation2], 16
  %24 = sfence
  $region1: #{tpu_custom_call.1} parent=0
    #allocation4 [shape = 'u8[4096]{0}', space=vmem, size = 0x1000, scoped, tag = 'input window, operand 1']
    #allocation5 [shape = 's32[2]{0}', space=sflag, size = 0x8, scoped, tag = 'scoped memory for tpu_custom_call.1']
    #allocation6 [shape = 's32[2]{0}', space=sflag, size = 0x8, scoped, tag = 'scoped memory for tpu_custom_call.1']
    #allocation7 [shape = 'u8[196608]{0}', space=vmem, size = 0x30000, scoped, tag = 'input window, operand 2, single buffered']
    #allocation8 [shape = 's32[1]{0}', space=sflag, size = 0x4, scoped, tag = 'scoped memory for tpu_custom_call.1']
    #allocation9 [shape = 'u8[65536]{0}', space=vmem, size = 0x10000, scoped, tag = 'input window, operand 4, single buffered']
    #allocation10 [shape = 'u8[65536]{0}', space=vmem, size = 0x10000, scoped, tag = 'input window, operand 6, single buffered']
    #allocation11 [shape = 's32[1]{0}', space=sflag, size = 0x4, scoped, tag = 'scoped memory for tpu_custom_call.1']
    #allocation12 [shape = 'u8[32768]{0}', space=vmem, size = 0x8000, scoped, tag = 'input window, operand 8, single buffered']
    #allocation13 [shape = 'u8[32768]{0}', space=vmem, size = 0x8000, scoped, tag = 'input window, operand 10, single buffered']
    #allocation14 [shape = 's32[1]{0}', space=sflag, size = 0x4, scoped, tag = 'scoped memory for tpu_custom_call.1']
    #allocation15 [shape = 'u8[65536]{0}', space=vmem, size = 0x10000, scoped, tag = 'input window, operand 12, single buffered']
    #allocation16 [shape = 'u8[32768]{0}', space=vmem, size = 0x8000, scoped, tag = 'input window, operand 14, single buffered']
    #allocation17 [shape = 's32[1]{0}', space=sflag, size = 0x4, scoped, tag = 'scoped memory for tpu_custom_call.1']
    #allocation18 [shape = 'u8[4096]{0}', space=vmem, size = 0x1000, scoped, tag = 'output window, operand 0']
    %25 = vsyncpa [#allocation5], 0
    %s26 = scalar_lea.sflag [#allocation5], 1
    %27 = vsyncpa %s26, 0
    %28 = vsyncpa [#allocation8], 0
    %29 = vsyncpa [#allocation11], 0
    %30 = vsyncpa [#allocation14], 0
    %31 = vsyncpa [#allocation17], 0
    %32 = vsyncpa [#allocation6], 0
    %s33 = scalar_lea.sflag [#allocation6], 1
    %34 = vsyncpa %s33, 0
    loop: start=0, step=1, limit=4
    $region2: #{tpu_custom_call.1} parent=1 // loop_pre_header
      _
    $region3: #{tpu_custom_call.1} parent=1 // loop_header
      %s36 = sphi 0, %s40
      %p37 = scmp.ge.s32.totalorder %s36, 4
      %s46 = sphi 0, %s48
      %s49 = sphi 0, %s46
      %s50 = sphi 0, %s49
      %s66 = sphi 0, %s50
      %s70 = sphi 0, %s70
      %s72 = sphi 0, %s70
      %s73 = sphi 0, %s72
      %s87 = sphi 0, %s73
      %s91 = sphi 0, %s91
      %s93 = sphi 0, %s91
      %s94 = sphi 0, %s93
      %s108 = sphi 0, %s94
      %s112 = sphi 0, %s112
      %s114 = sphi 0, %s112
      %s115 = sphi 0, %s114
      %s129 = sphi 0, %s115
      %s133 = sphi 0, %s133
      %s135 = sphi 0, %s133
      %s136 = sphi 0, %s135
      %s150 = sphi 0, %s136
      %s154 = sphi 0, %s154
      %s156 = sphi 0, %s154
      %s157 = sphi 0, %s156
      %s171 = sphi 0, %s157
      %s175 = sphi 0, %s175
      %s177 = sphi 0, %s175
      %s178 = sphi 0, %s177
      %s192 = sphi 0, %s178
      %s196 = sphi 0, %s196
      %s198 = sphi 0, %s196
      %s199 = sphi 0, %s198
      %s213 = sphi 0, %s199
      %s217 = sphi 0, %s217
      %s219 = sphi 0, %s217
      %s220 = sphi 0, %s219
      %s234 = sphi 0, %s220
      %s238 = sphi 0, %s238
      %s240 = sphi 0, %s238
      %s241 = sphi 0, %s240
      %s255 = sphi 0, %s241
      %s259 = sphi 0, %s259
      %s261 = sphi 0, %s259
      %s262 = sphi 0, %s261
      %s276 = sphi 0, %s262
      %s280 = sphi 0, %s280
      %s282 = sphi 0, %s280
      %s283 = sphi 0, %s282
      %s297 = sphi 0, %s283
      %s301 = sphi 0, %s301
      %s303 = sphi 0, %s301
      %s304 = sphi 0, %s303
      %s318 = sphi 0, %s304
      %s322 = sphi 0, %s322
      %s324 = sphi 0, %s322
      %s325 = sphi 0, %s324
      %s339 = sphi 0, %s325
      %s343 = sphi 0, %s343
      %s345 = sphi 0, %s343
      %s346 = sphi 0, %s345
      %s360 = sphi 0, %s346
      %s366 = sphi 0, %s368
      %s369 = sphi 0, %s366
      %s370 = sphi 0, %s369
      %s386 = sphi 0, %s370
    $region4: #{tpu_custom_call.1} parent=1 // loop_header_branch
      %39 = sbr.rel (%p37) target = $region8
    $region5: #{tpu_custom_call.1} parent=1 // loop_body
      %s41 = ssub.s32 %s36, 1
      %s42 = ssub.s32 %s36, 2
      %s43 = sadd.s32 %s36, 1
      %s44 = ssub.s32 %s36, %s43
      %p45 = scmp.eq.s32.totalorder %s44, 0
      %s47 = sadd.s32 %s46, 1
      %s48 = scalar_select %p45, %s46, %s47
      %p51 = pneg %p45
      %p52 = scmp.eq.s32.totalorder %s36, 1
      %p53 = por %p51, %p52
      %p54 = scmp.ne.s32.totalorder %s46, %s49
      %p55 = scmp.eq.s32.totalorder %s36, 0
      %p56 = por %p54, %p55
      %p57 = scmp.ne.s32.totalorder %s46, %s49
      %p58 = scmp.eq.s32.totalorder %s41, 1
      %p59 = por %p57, %p58
      %p60 = scmp.ne.s32.totalorder %s49, %s50
      %p61 = scmp.eq.s32.totalorder %s41, 0
      %p62 = por %p60, %p61
      %p63 = scmp.ne.s32.totalorder %s49, %s50
      %p64 = scmp.eq.s32.totalorder %s42, 1
      %p65 = por %p63, %p64
      %p67 = scmp.ne.s32.totalorder %s50, %s66
      %p68 = scmp.eq.s32.totalorder %s42, 0
      %p69 = por %p67, %p68
      %s71 = sadd.s32 %s70, 1
      %p74 = scmp.eq.s32.totalorder %s36, 1
      %p75 = scmp.ne.s32.totalorder %s70, %s72
      %p76 = scmp.eq.s32.totalorder %s36, 0
      %p77 = por %p75, %p76
      %p78 = scmp.ne.s32.totalorder %s70, %s72
      %p79 = scmp.eq.s32.totalorder %s41, 1
      %p80 = por %p78, %p79
      %p81 = scmp.ne.s32.totalorder %s72, %s73
      %p82 = scmp.eq.s32.totalorder %s41, 0
      %p83 = por %p81, %p82
      %p84 = scmp.ne.s32.totalorder %s72, %s73
      %p85 = scmp.eq.s32.totalorder %s42, 1
      %p86 = por %p84, %p85
      %p88 = scmp.ne.s32.totalorder %s73, %s87
      %p89 = scmp.eq.s32.totalorder %s42, 0
      %p90 = por %p88, %p89
      %s92 = sadd.s32 %s91, 1
      %p95 = scmp.eq.s32.totalorder %s36, 1
      %p96 = scmp.ne.s32.totalorder %s91, %s93
      %p97 = scmp.eq.s32.totalorder %s36, 0
      %p98 = por %p96, %p97
      %p99 = scmp.ne.s32.totalorder %s91, %s93
      %p100 = scmp.eq.s32.totalorder %s41, 1
      %p101 = por %p99, %p100
      %p102 = scmp.ne.s32.totalorder %s93, %s94
      %p103 = scmp.eq.s32.totalorder %s41, 0
      %p104 = por %p102, %p103
      %p105 = scmp.ne.s32.totalorder %s93, %s94
      %p106 = scmp.eq.s32.totalorder %s42, 1
      %p107 = por %p105, %p106
      %p109 = scmp.ne.s32.totalorder %s94, %s108
      %p110 = scmp.eq.s32.totalorder %s42, 0
      %p111 = por %p109, %p110
      %s113 = sadd.s32 %s112, 1
      %p116 = scmp.eq.s32.totalorder %s36, 1
      %p117 = scmp.ne.s32.totalorder %s112, %s114
      %p118 = scmp.eq.s32.totalorder %s36, 0
      %p119 = por %p117, %p118
      %p120 = scmp.ne.s32.totalorder %s112, %s114
      %p121 = scmp.eq.s32.totalorder %s41, 1
      %p122 = por %p120, %p121
      %p123 = scmp.ne.s32.totalorder %s114, %s115
      %p124 = scmp.eq.s32.totalorder %s41, 0
      %p125 = por %p123, %p124
      %p126 = scmp.ne.s32.totalorder %s114, %s115
      %p127 = scmp.eq.s32.totalorder %s42, 1
      %p128 = por %p126, %p127
      %p130 = scmp.ne.s32.totalorder %s115, %s129
      %p131 = scmp.eq.s32.totalorder %s42, 0
      %p132 = por %p130, %p131
      %s134 = sadd.s32 %s133, 1
      %p137 = scmp.eq.s32.totalorder %s36, 1
      %p138 = scmp.ne.s32.totalorder %s133, %s135
      %p139 = scmp.eq.s32.totalorder %s36, 0
      %p140 = por %p138, %p139
      %p141 = scmp.ne.s32.totalorder %s133, %s135
      %p142 = scmp.eq.s32.totalorder %s41, 1
      %p143 = por %p141, %p142
      %p144 = scmp.ne.s32.totalorder %s135, %s136
      %p145 = scmp.eq.s32.totalorder %s41, 0
      %p146 = por %p144, %p145
      %p147 = scmp.ne.s32.totalorder %s135, %s136
      %p148 = scmp.eq.s32.totalorder %s42, 1
      %p149 = por %p147, %p148
      %p151 = scmp.ne.s32.totalorder %s136, %s150
      %p152 = scmp.eq.s32.totalorder %s42, 0
      %p153 = por %p151, %p152
      %s155 = sadd.s32 %s154, 1
      %p158 = scmp.eq.s32.totalorder %s36, 1
      %p159 = scmp.ne.s32.totalorder %s154, %s156
      %p160 = scmp.eq.s32.totalorder %s36, 0
      %p161 = por %p159, %p160
      %p162 = scmp.ne.s32.totalorder %s154, %s156
      %p163 = scmp.eq.s32.totalorder %s41, 1
      %p164 = por %p162, %p163
      %p165 = scmp.ne.s32.totalorder %s156, %s157
      %p166 = scmp.eq.s32.totalorder %s41, 0
      %p167 = por %p165, %p166
      %p168 = scmp.ne.s32.totalorder %s156, %s157
      %p169 = scmp.eq.s32.totalorder %s42, 1
      %p170 = por %p168, %p169
      %p172 = scmp.ne.s32.totalorder %s157, %s171
      %p173 = scmp.eq.s32.totalorder %s42, 0
      %p174 = por %p172, %p173
      %s176 = sadd.s32 %s175, 1
      %p179 = scmp.eq.s32.totalorder %s36, 1
      %p180 = scmp.ne.s32.totalorder %s175, %s177
      %p181 = scmp.eq.s32.totalorder %s36, 0
      %p182 = por %p180, %p181
      %p183 = scmp.ne.s32.totalorder %s175, %s177
      %p184 = scmp.eq.s32.totalorder %s41, 1
      %p185 = por %p183, %p184
      %p186 = scmp.ne.s32.totalorder %s177, %s178
      %p187 = scmp.eq.s32.totalorder %s41, 0
      %p188 = por %p186, %p187
      %p189 = scmp.ne.s32.totalorder %s177, %s178
      %p190 = scmp.eq.s32.totalorder %s42, 1
      %p191 = por %p189, %p190
      %p193 = scmp.ne.s32.totalorder %s178, %s192
      %p194 = scmp.eq.s32.totalorder %s42, 0
      %p195 = por %p193, %p194
      %s197 = sadd.s32 %s196, 1
      %p200 = scmp.eq.s32.totalorder %s36, 1
      %p201 = scmp.ne.s32.totalorder %s196, %s198
      %p202 = scmp.eq.s32.totalorder %s36, 0
      %p203 = por %p201, %p202
      %p204 = scmp.ne.s32.totalorder %s196, %s198
      %p205 = scmp.eq.s32.totalorder %s41, 1
      %p206 = por %p204, %p205
      %p207 = scmp.ne.s32.totalorder %s198, %s199
      %p208 = scmp.eq.s32.totalorder %s41, 0
      %p209 = por %p207, %p208
      %p210 = scmp.ne.s32.totalorder %s198, %s199
      %p211 = scmp.eq.s32.totalorder %s42, 1
      %p212 = por %p210, %p211
      %p214 = scmp.ne.s32.totalorder %s199, %s213
      %p215 = scmp.eq.s32.totalorder %s42, 0
      %p216 = por %p214, %p215
      %s218 = sadd.s32 %s217, 1
      %p221 = scmp.eq.s32.totalorder %s36, 1
      %p222 = scmp.ne.s32.totalorder %s217, %s219
      %p223 = scmp.eq.s32.totalorder %s36, 0
      %p224 = por %p222, %p223
      %p225 = scmp.ne.s32.totalorder %s217, %s219
      %p226 = scmp.eq.s32.totalorder %s41, 1
      %p227 = por %p225, %p226
      %p228 = scmp.ne.s32.totalorder %s219, %s220
      %p229 = scmp.eq.s32.totalorder %s41, 0
      %p230 = por %p228, %p229
      %p231 = scmp.ne.s32.totalorder %s219, %s220
      %p232 = scmp.eq.s32.totalorder %s42, 1
      %p233 = por %p231, %p232
      %p235 = scmp.ne.s32.totalorder %s220, %s234
      %p236 = scmp.eq.s32.totalorder %s42, 0
      %p237 = por %p235, %p236
      %s239 = sadd.s32 %s238, 1
      %p242 = scmp.eq.s32.totalorder %s36, 1
      %p243 = scmp.ne.s32.totalorder %s238, %s240
      %p244 = scmp.eq.s32.totalorder %s36, 0
      %p245 = por %p243, %p244
      %p246 = scmp.ne.s32.totalorder %s238, %s240
      %p247 = scmp.eq.s32.totalorder %s41, 1
      %p248 = por %p246, %p247
      %p249 = scmp.ne.s32.totalorder %s240, %s241
      %p250 = scmp.eq.s32.totalorder %s41, 0
      %p251 = por %p249, %p250
      %p252 = scmp.ne.s32.totalorder %s240, %s241
      %p253 = scmp.eq.s32.totalorder %s42, 1
      %p254 = por %p252, %p253
      %p256 = scmp.ne.s32.totalorder %s241, %s255
      %p257 = scmp.eq.s32.totalorder %s42, 0
      %p258 = por %p256, %p257
      %s260 = sadd.s32 %s259, 1
      %p263 = scmp.eq.s32.totalorder %s36, 1
      %p264 = scmp.ne.s32.totalorder %s259, %s261
      %p265 = scmp.eq.s32.totalorder %s36, 0
      %p266 = por %p264, %p265
      %p267 = scmp.ne.s32.totalorder %s259, %s261
      %p268 = scmp.eq.s32.totalorder %s41, 1
      %p269 = por %p267, %p268
      %p270 = scmp.ne.s32.totalorder %s261, %s262
      %p271 = scmp.eq.s32.totalorder %s41, 0
      %p272 = por %p270, %p271
      %p273 = scmp.ne.s32.totalorder %s261, %s262
      %p274 = scmp.eq.s32.totalorder %s42, 1
      %p275 = por %p273, %p274
      %p277 = scmp.ne.s32.totalorder %s262, %s276
      %p278 = scmp.eq.s32.totalorder %s42, 0
      %p279 = por %p277, %p278
      %s281 = sadd.s32 %s280, 1
      %p284 = scmp.eq.s32.totalorder %s36, 1
      %p285 = scmp.ne.s32.totalorder %s280, %s282
      %p286 = scmp.eq.s32.totalorder %s36, 0
      %p287 = por %p285, %p286
      %p288 = scmp.ne.s32.totalorder %s280, %s282
      %p289 = scmp.eq.s32.totalorder %s41, 1
      %p290 = por %p288, %p289
      %p291 = scmp.ne.s32.totalorder %s282, %s283
      %p292 = scmp.eq.s32.totalorder %s41, 0
      %p293 = por %p291, %p292
      %p294 = scmp.ne.s32.totalorder %s282, %s283
      %p295 = scmp.eq.s32.totalorder %s42, 1
      %p296 = por %p294, %p295
      %p298 = scmp.ne.s32.totalorder %s283, %s297
      %p299 = scmp.eq.s32.totalorder %s42, 0
      %p300 = por %p298, %p299
      %s302 = sadd.s32 %s301, 1
      %p305 = scmp.eq.s32.totalorder %s36, 1
      %p306 = scmp.ne.s32.totalorder %s301, %s303
      %p307 = scmp.eq.s32.totalorder %s36, 0
      %p308 = por %p306, %p307
      %p309 = scmp.ne.s32.totalorder %s301, %s303
      %p310 = scmp.eq.s32.totalorder %s41, 1
      %p311 = por %p309, %p310
      %p312 = scmp.ne.s32.totalorder %s303, %s304
      %p313 = scmp.eq.s32.totalorder %s41, 0
      %p314 = por %p312, %p313
      %p315 = scmp.ne.s32.totalorder %s303, %s304
      %p316 = scmp.eq.s32.totalorder %s42, 1
      %p317 = por %p315, %p316
      %p319 = scmp.ne.s32.totalorder %s304, %s318
      %p320 = scmp.eq.s32.totalorder %s42, 0
      %p321 = por %p319, %p320
      %s323 = sadd.s32 %s322, 1
      %p326 = scmp.eq.s32.totalorder %s36, 1
      %p327 = scmp.ne.s32.totalorder %s322, %s324
      %p328 = scmp.eq.s32.totalorder %s36, 0
      %p329 = por %p327, %p328
      %p330 = scmp.ne.s32.totalorder %s322, %s324
      %p331 = scmp.eq.s32.totalorder %s41, 1
      %p332 = por %p330, %p331
      %p333 = scmp.ne.s32.totalorder %s324, %s325
      %p334 = scmp.eq.s32.totalorder %s41, 0
      %p335 = por %p333, %p334
      %p336 = scmp.ne.s32.totalorder %s324, %s325
      %p337 = scmp.eq.s32.totalorder %s42, 1
      %p338 = por %p336, %p337
      %p340 = scmp.ne.s32.totalorder %s325, %s339
      %p341 = scmp.eq.s32.totalorder %s42, 0
      %p342 = por %p340, %p341
      %s344 = sadd.s32 %s343, 1
      %p347 = scmp.eq.s32.totalorder %s36, 1
      %p348 = scmp.ne.s32.totalorder %s343, %s345
      %p349 = scmp.eq.s32.totalorder %s36, 0
      %p350 = por %p348, %p349
      %p351 = scmp.ne.s32.totalorder %s343, %s345
      %p352 = scmp.eq.s32.totalorder %s41, 1
      %p353 = por %p351, %p352
      %p354 = scmp.ne.s32.totalorder %s345, %s346
      %p355 = scmp.eq.s32.totalorder %s41, 0
      %p356 = por %p354, %p355
      %p357 = scmp.ne.s32.totalorder %s345, %s346
      %p358 = scmp.eq.s32.totalorder %s42, 1
      %p359 = por %p357, %p358
      %p361 = scmp.ne.s32.totalorder %s346, %s360
      %p362 = scmp.eq.s32.totalorder %s42, 0
      %p363 = por %p361, %p362
      %s364 = ssub.s32 %s36, %s43
      %p365 = scmp.eq.s32.totalorder %s364, 0
      %s367 = sadd.s32 %s366, 1
      %s368 = scalar_select %p365, %s366, %s367
      %p371 = pneg %p365
      %p372 = scmp.eq.s32.totalorder %s36, 1
      %p373 = por %p371, %p372
      %p374 = scmp.ne.s32.totalorder %s366, %s369
      %p375 = scmp.eq.s32.totalorder %s36, 0
      %p376 = por %p374, %p375
      %p377 = scmp.ne.s32.totalorder %s366, %s369
      %p378 = scmp.eq.s32.totalorder %s41, 1
      %p379 = por %p377, %p378
      %p380 = scmp.ne.s32.totalorder %s369, %s370
      %p381 = scmp.eq.s32.totalorder %s41, 0
      %p382 = por %p380, %p381
      %p383 = scmp.ne.s32.totalorder %s369, %s370
      %p384 = scmp.eq.s32.totalorder %s42, 1
      %p385 = por %p383, %p384
      %p387 = scmp.ne.s32.totalorder %s370, %s386
      %p388 = scmp.eq.s32.totalorder %s42, 0
      %p389 = por %p387, %p388
      %p390 = scmp.le.s32.totalorder 1, %s36
      %p391 = scmp.lt.s32.totalorder %s36, 3
      %p392 = pnand %p390, %p391
      %p393 = pneg %p392
      // Predicated region
      $region9: #{tpu_custom_call.1} parent=5 // pred_check
        _
      $region10: #{tpu_custom_call.1} parent=5 // pred_check_branch
        %395 = sbr.rel (%p392) target = $region12
      $region11: #{tpu_custom_call.1} parent=5 // pred_region
        %s396 = ssub.s32 %s36, 1
        // Predicated region
        $region13: #{tpu_custom_call.1} parent=11 // pred_check
          %p397 = pneg %p83
        $region14: #{tpu_custom_call.1} parent=11 // pred_check_branch
          %399 = sbr.rel (%p397) target = $region16
        $region15: #{tpu_custom_call.1} parent=11 // pred_region
          %s401 = ssub.s32 6144, 6144
          %402 = vsyncadd [#allocation8], %s401
          %s403 = sshll.u32 [#allocation7], 4
          %s404 = int_to_ptr.vmem [resolvable:$true] %s403
          %409 = dma.hbm_to_vmem [thread:$0]  %s2, 6144, %s404, [#allocation8], 384, 384, 24
        $region16: #{tpu_custom_call.1} parent=11 // pred_fallthru
          _
        // Predicated region
        $region17: #{tpu_custom_call.1} parent=11 // pred_check
          %p410 = pneg %p104
        $region18: #{tpu_custom_call.1} parent=11 // pred_check_branch
          %412 = sbr.rel (%p410) target = $region20
        $region19: #{tpu_custom_call.1} parent=11 // pred_region
          _
        $region20: #{tpu_custom_call.1} parent=11 // pred_fallthru
          _
        // Predicated region
        $region21: #{tpu_custom_call.1} parent=11 // pred_check
          %p413 = pneg %p125
        $region22: #{tpu_custom_call.1} parent=11 // pred_check_branch
          %415 = sbr.rel (%p413) target = $region24
        $region23: #{tpu_custom_call.1} parent=11 // pred_region
          %s417 = ssub.s32 2048, 2048
          %418 = vsyncadd [#allocation8], %s417
          %s419 = sshll.u32 [#allocation9], 4
          %s420 = int_to_ptr.vmem [resolvable:$true] %s419
          %425 = dma.hbm_to_vmem [thread:$0]  %s4, 2048, %s420, [#allocation8], 64, 64, 4
        $region24: #{tpu_custom_call.1} parent=11 // pred_fallthru
          _
        // Predicated region
        $region25: #{tpu_custom_call.1} parent=11 // pred_check
          %p426 = pneg %p146
        $region26: #{tpu_custom_call.1} parent=11 // pred_check_branch
          %428 = sbr.rel (%p426) target = $region28
        $region27: #{tpu_custom_call.1} parent=11 // pred_region
          _
        $region28: #{tpu_custom_call.1} parent=11 // pred_fallthru
          _
        // Predicated region
        $region29: #{tpu_custom_call.1} parent=11 // pred_check
          %p429 = pneg %p167
        $region30: #{tpu_custom_call.1} parent=11 // pred_check_branch
          %431 = sbr.rel (%p429) target = $region32
        $region31: #{tpu_custom_call.1} parent=11 // pred_region
          %s433 = ssub.s32 2048, 2048
          %434 = vsyncadd [#allocation11], %s433
          %s435 = sshll.u32 [#allocation10], 4
          %s436 = int_to_ptr.vmem [resolvable:$true] %s435
          %441 = dma.hbm_to_vmem [thread:$0]  %s6, 2048, %s436, [#allocation11], 128, 128, 8
        $region32: #{tpu_custom_call.1} parent=11 // pred_fallthru
          _
        // Predicated region
        $region33: #{tpu_custom_call.1} parent=11 // pred_check
          %p442 = pneg %p188
        $region34: #{tpu_custom_call.1} parent=11 // pred_check_branch
          %444 = sbr.rel (%p442) target = $region36
        $region35: #{tpu_custom_call.1} parent=11 // pred_region
          _
        $region36: #{tpu_custom_call.1} parent=11 // pred_fallthru
          _
        // Predicated region
        $region37: #{tpu_custom_call.1} parent=11 // pred_check
          %p445 = pneg %p209
        $region38: #{tpu_custom_call.1} parent=11 // pred_check_branch
          %447 = sbr.rel (%p445) target = $region40
        $region39: #{tpu_custom_call.1} parent=11 // pred_region
          %s449 = ssub.s32 1024, 1024
          %450 = vsyncadd [#allocation11], %s449
          %s451 = sshll.u32 [#allocation12], 4
          %s452 = int_to_ptr.vmem [resolvable:$true] %s451
          %457 = dma.hbm_to_vmem [thread:$0]  %s8, 1024, %s452, [#allocation11], 64, 64, 4
        $region40: #{tpu_custom_call.1} parent=11 // pred_fallthru
          _
        // Predicated region
        $region41: #{tpu_custom_call.1} parent=11 // pred_check
          %p458 = pneg %p230
        $region42: #{tpu_custom_call.1} parent=11 // pred_check_branch
          %460 = sbr.rel (%p458) target = $region44
        $region43: #{tpu_custom_call.1} parent=11 // pred_region
          _
        $region44: #{tpu_custom_call.1} parent=11 // pred_fallthru
          _
        // Predicated region
        $region45: #{tpu_custom_call.1} parent=11 // pred_check
          %p461 = pneg %p251
        $region46: #{tpu_custom_call.1} parent=11 // pred_check_branch
          %463 = sbr.rel (%p461) target = $region48
        $region47: #{tpu_custom_call.1} parent=11 // pred_region
          %s465 = ssub.s32 1024, 1024
          %466 = vsyncadd [#allocation14], %s465
          %s467 = sshll.u32 [#allocation13], 4
          %s468 = int_to_ptr.vmem [resolvable:$true] %s467
          %473 = dma.hbm_to_vmem [thread:$0]  %s10, 1024, %s468, [#allocation14], 64, 64, 4
        $region48: #{tpu_custom_call.1} parent=11 // pred_fallthru
          _
        // Predicated region
        $region49: #{tpu_custom_call.1} parent=11 // pred_check
          %p474 = pneg %p272
        $region50: #{tpu_custom_call.1} parent=11 // pred_check_branch
          %476 = sbr.rel (%p474) target = $region52
        $region51: #{tpu_custom_call.1} parent=11 // pred_region
          _
        $region52: #{tpu_custom_call.1} parent=11 // pred_fallthru
          _
        // Predicated region
        $region53: #{tpu_custom_call.1} parent=11 // pred_check
          %p477 = pneg %p293
        $region54: #{tpu_custom_call.1} parent=11 // pred_check_branch
          %479 = sbr.rel (%p477) target = $region56
        $region55: #{tpu_custom_call.1} parent=11 // pred_region
          %s481 = ssub.s32 2048, 2048
          %482 = vsyncadd [#allocation14], %s481
          %s483 = sshll.u32 [#allocation15], 4
          %s484 = int_to_ptr.vmem [resolvable:$true] %s483
          %489 = dma.hbm_to_vmem [thread:$0]  %s12, 2048, %s484, [#allocation14], 128, 128, 8
        $region56: #{tpu_custom_call.1} parent=11 // pred_fallthru
          _
        // Predicated region
        $region57: #{tpu_custom_call.1} parent=11 // pred_check
          %p490 = pneg %p314
        $region58: #{tpu_custom_call.1} parent=11 // pred_check_branch
          %492 = sbr.rel (%p490) target = $region60
        $region59: #{tpu_custom_call.1} parent=11 // pred_region
          _
        $region60: #{tpu_custom_call.1} parent=11 // pred_fallthru
          _
        // Predicated region
        $region61: #{tpu_custom_call.1} parent=11 // pred_check
          %p493 = pneg %p335
        $region62: #{tpu_custom_call.1} parent=11 // pred_check_branch
          %495 = sbr.rel (%p493) target = $region64
        $region63: #{tpu_custom_call.1} parent=11 // pred_region
          %s497 = ssub.s32 1024, 1024
          %498 = vsyncadd [#allocation17], %s497
          %s499 = sshll.u32 [#allocation16], 4
          %s500 = int_to_ptr.vmem [resolvable:$true] %s499
          %505 = dma.hbm_to_vmem [thread:$0]  %s14, 1024, %s500, [#allocation17], 64, 64, 4
        $region64: #{tpu_custom_call.1} parent=11 // pred_fallthru
          _
        // Predicated region
        $region65: #{tpu_custom_call.1} parent=11 // pred_check
          %p506 = pneg %p356
        $region66: #{tpu_custom_call.1} parent=11 // pred_check_branch
          %508 = sbr.rel (%p506) target = $region68
        $region67: #{tpu_custom_call.1} parent=11 // pred_region
          _
        $region68: #{tpu_custom_call.1} parent=11 // pred_fallthru
          _
      $region12: #{tpu_custom_call.1} parent=5 // pred_fallthru
        _
      %p509 = scmp.lt.s32.totalorder %s36, 2
      // Predicated region
      $region69: #{tpu_custom_call.1} parent=5 // pred_check
        %p510 = pneg %p509
      $region70: #{tpu_custom_call.1} parent=5 // pred_check_branch
        %512 = sbr.rel (%p510) target = $region72
      $region71: #{tpu_custom_call.1} parent=5 // pred_region
        // Predicated region
        $region73: #{tpu_custom_call.1} parent=71 // pred_check
          %p513 = pneg %p56
        $region74: #{tpu_custom_call.1} parent=71 // pred_check_branch
          %515 = sbr.rel (%p513) target = $region76
        $region75: #{tpu_custom_call.1} parent=71 // pred_region
          %s516 = sand.u32 %s46, 1
          %s517 = scalar_lea.sflag [#allocation5], %s516
          %s518 = sand.u32 %s46, 1
          %s519 = smul.addr %s518, 4
          %s520 = scalar_lea.vmem [#allocation4], %s519
          %s522 = ssub.s32 64, 64
          %523 = vsyncadd %s517, %s522
          %s524 = smul.addr %s36, 64
          %s525 = scalar_lea.hbm %s1, %s524
          %s527 = sshll.u32 %s520, 4
          %s528 = int_to_ptr.vmem [resolvable:$true] %s527
          %530 = dma.hbm_to_vmem [thread:$0]  %s525, 64, %s528, %s517
        $region76: #{tpu_custom_call.1} parent=71 // pred_fallthru
          _
      $region72: #{tpu_custom_call.1} parent=5 // pred_fallthru
        _
      %p531 = scmp.le.s32.totalorder 1, %s36
      %p532 = scmp.lt.s32.totalorder %s36, 3
      %p533 = pnand %p531, %p532
      %p534 = pneg %p533
      // Predicated region
      $region77: #{tpu_custom_call.1} parent=5 // pred_check
        _
      $region78: #{tpu_custom_call.1} parent=5 // pred_check_branch
        %536 = sbr.rel (%p533) target = $region80
      $region79: #{tpu_custom_call.1} parent=5 // pred_region
        %s537 = ssub.s32 %s36, 1
        %s538 = sand.u32 %s49, 1
        %s539 = scalar_lea.sflag [#allocation5], %s538
        %s540 = sand.u32 %s49, 1
        %s541 = smul.addr %s540, 4
        %s542 = scalar_lea.vmem [#allocation4], %s541
        // Predicated region
        $region81: #{tpu_custom_call.1} parent=79 // pred_check
          %p543 = pneg %p62
        $region82: #{tpu_custom_call.1} parent=79 // pred_check_branch
          %545 = sbr.rel (%p543) target = $region84
        $region83: #{tpu_custom_call.1} parent=79 // pred_region
          %546 = dma.done %s539, 64
        $region84: #{tpu_custom_call.1} parent=79 // pred_fallthru
          _
        // Predicated region
        $region85: #{tpu_custom_call.1} parent=79 // pred_check
          %p547 = pneg %p83
        $region86: #{tpu_custom_call.1} parent=79 // pred_check_branch
          %549 = sbr.rel (%p547) target = $region88
        $region87: #{tpu_custom_call.1} parent=79 // pred_region
          %550 = dma.done [#allocation8], 6144
        $region88: #{tpu_custom_call.1} parent=79 // pred_fallthru
          _
        // Predicated region
        $region89: #{tpu_custom_call.1} parent=79 // pred_check
          %p551 = pneg %p125
        $region90: #{tpu_custom_call.1} parent=79 // pred_check_branch
          %553 = sbr.rel (%p551) target = $region92
        $region91: #{tpu_custom_call.1} parent=79 // pred_region
          %554 = dma.done [#allocation8], 2048
        $region92: #{tpu_custom_call.1} parent=79 // pred_fallthru
          _
        // Predicated region
        $region93: #{tpu_custom_call.1} parent=79 // pred_check
          %p555 = pneg %p167
        $region94: #{tpu_custom_call.1} parent=79 // pred_check_branch
          %557 = sbr.rel (%p555) target = $region96
        $region95: #{tpu_custom_call.1} parent=79 // pred_region
          %558 = dma.done [#allocation11], 2048
        $region96: #{tpu_custom_call.1} parent=79 // pred_fallthru
          _
        // Predicated region
        $region97: #{tpu_custom_call.1} parent=79 // pred_check
          %p559 = pneg %p209
        $region98: #{tpu_custom_call.1} parent=79 // pred_check_branch
          %561 = sbr.rel (%p559) target = $region100
        $region99: #{tpu_custom_call.1} parent=79 // pred_region
          %562 = dma.done [#allocation11], 1024
        $region100: #{tpu_custom_call.1} parent=79 // pred_fallthru
          _
        // Predicated region
        $region101: #{tpu_custom_call.1} parent=79 // pred_check
          %p563 = pneg %p251
        $region102: #{tpu_custom_call.1} parent=79 // pred_check_branch
          %565 = sbr.rel (%p563) target = $region104
        $region103: #{tpu_custom_call.1} parent=79 // pred_region
          %566 = dma.done [#allocation14], 1024
        $region104: #{tpu_custom_call.1} parent=79 // pred_fallthru
          _
        // Predicated region
        $region105: #{tpu_custom_call.1} parent=79 // pred_check
          %p567 = pneg %p293
        $region106: #{tpu_custom_call.1} parent=79 // pred_check_branch
          %569 = sbr.rel (%p567) target = $region108
        $region107: #{tpu_custom_call.1} parent=79 // pred_region
          %570 = dma.done [#allocation14], 2048
        $region108: #{tpu_custom_call.1} parent=79 // pred_fallthru
          _
        // Predicated region
        $region109: #{tpu_custom_call.1} parent=79 // pred_check
          %p571 = pneg %p335
        $region110: #{tpu_custom_call.1} parent=79 // pred_check_branch
          %573 = sbr.rel (%p571) target = $region112
        $region111: #{tpu_custom_call.1} parent=79 // pred_region
          %574 = dma.done [#allocation17], 1024
        $region112: #{tpu_custom_call.1} parent=79 // pred_fallthru
          _
        %s575 = sand.u32 %s49, 1
        %s576 = scalar_lea.sflag [#allocation5], %s575
        %s577 = sand.u32 %s49, 1
        %s578 = smul.addr %s577, 4
        %s579 = scalar_lea.vmem [#allocation4], %s578
        %p580 = pneg %p62
        %p581 = pneg %p59
        %p582 = pneg %p83
        %p583 = pneg %p80
        %p584 = pneg %p104
        %p585 = pneg %p101
        %p586 = pneg %p125
        %p587 = pneg %p122
        %p588 = pneg %p146
        %p589 = pneg %p143
        %p590 = pneg %p167
        %p591 = pneg %p164
        %p592 = pneg %p188
        %p593 = pneg %p185
        %p594 = pneg %p209
        %p595 = pneg %p206
        %p596 = pneg %p230
        %p597 = pneg %p227
        %p598 = pneg %p251
        %p599 = pneg %p248
        %p600 = pneg %p272
        %p601 = pneg %p269
        %p602 = pneg %p293
        %p603 = pneg %p290
        %p604 = pneg %p314
        %p605 = pneg %p311
        %p606 = pneg %p335
        %p607 = pneg %p332
        %p608 = pneg %p356
        %p609 = pneg %p353
        %p610 = pneg %p382
        %p611 = pneg %p379
        %s612 = sand.u32 %s369, 1
        %s613 = scalar_lea.sflag [#allocation6], %s612
        %s614 = sand.u32 %s369, 1
        %s615 = smul.addr %s614, 4
        %s616 = scalar_lea.vmem [#allocation18], %s615
        %s618 = sld [smem:[#allocation3 + %s41]]
        %v619 = vld [vmem:[%s542] sm:$0xf]
        %v620 = vunpack.c.l.bf16 %v619
        %v621 = vlaneseq
        %v622 = vshrl.u32 %v621, 7
        %v623 = vlaneseq
        %v624 = vand.u32 %v623, 127
        %v625 = vstv %s618
        %vm626 = vcmp.lt.s32.totalorder %v622, %v625
        %v627 = vsel %vm626, 1, 0
        %v628 = vcvt.s32.f32 %v627
        %vm629 = vcmp.lt.s32.totalorder %v624, %v625
        %v630 = vsel %vm629, 0.0, -10000.0
        %v631 = vmul.f32 %v620, %v628
        %v632 = vpack.c.bf16 %v631, %v631
        %v633 = vld [vmem:[#allocation7] sm:$0xff]
        %v634 = vld [vmem:[#allocation7 + $0x8] sm:$0xff]
        %v635 = vld [vmem:[#allocation7 + $0x10] sm:$0xff]
        %v636 = vld [vmem:[#allocation7 + $0x18] sm:$0xff]
        %v637 = vld [vmem:[#allocation7 + $0x20] sm:$0xff]
        %v638 = vld [vmem:[#allocation7 + $0x28] sm:$0xff]
        %v639 = vld [vmem:[#allocation7 + $0x30] sm:$0xff]
        %v640 = vld [vmem:[#allocation7 + $0x38] sm:$0xff]
        %v641 = vld [vmem:[#allocation7 + $0x40] sm:$0xff]
        %v642 = vld [vmem:[#allocation7 + $0x48] sm:$0xff]
        %v643 = vld [vmem:[#allocation7 + $0x50] sm:$0xff]
        %v644 = vld [vmem:[#allocation7 + $0x58] sm:$0xff]
        %v645 = vld [vmem:[#allocation7 + $0x60] sm:$0xff]
        %v646 = vld [vmem:[#allocation7 + $0x68] sm:$0xff]
        %v647 = vld [vmem:[#allocation7 + $0x70] sm:$0xff]
        %v648 = vld [vmem:[#allocation7 + $0x78] sm:$0xff]
        %v649 = vld [vmem:[#allocation7 + $0x80] sm:$0xff]
        %v650 = vld [vmem:[#allocation7 + $0x88] sm:$0xff]
        %v651 = vld [vmem:[#allocation7 + $0x90] sm:$0xff]
        %v652 = vld [vmem:[#allocation7 + $0x98] sm:$0xff]
        %v653 = vld [vmem:[#allocation7 + $0xa0] sm:$0xff]
        %v654 = vld [vmem:[#allocation7 + $0xa8] sm:$0xff]
        %v655 = vld [vmem:[#allocation7 + $0xb0] sm:$0xff]
        %v656 = vld [vmem:[#allocation7 + $0xb8] sm:$0xff]
        %v657 = vld [vmem:[#allocation7 + $0xc0] sm:$0xff]
        %v658 = vld [vmem:[#allocation7 + $0xc8] sm:$0xff]
        %v659 = vld [vmem:[#allocation7 + $0xd0] sm:$0xff]
        %v660 = vld [vmem:[#allocation7 + $0xd8] sm:$0xff]
        %v661 = vld [vmem:[#allocation7 + $0xe0] sm:$0xff]
        %v662 = vld [vmem:[#allocation7 + $0xe8] sm:$0xff]
        %v663 = vld [vmem:[#allocation7 + $0xf0] sm:$0xff]
        %v664 = vld [vmem:[#allocation7 + $0xf8] sm:$0xff]
        %v665 = vld [vmem:[#allocation7 + $0x100] sm:$0xff]
        %v666 = vld [vmem:[#allocation7 + $0x108] sm:$0xff]
        %v667 = vld [vmem:[#allocation7 + $0x110] sm:$0xff]
        %v668 = vld [vmem:[#allocation7 + $0x118] sm:$0xff]
        %v669 = vld [vmem:[#allocation7 + $0x120] sm:$0xff]
        %v670 = vld [vmem:[#allocation7 + $0x128] sm:$0xff]
        %v671 = vld [vmem:[#allocation7 + $0x130] sm:$0xff]
        %v672 = vld [vmem:[#allocation7 + $0x138] sm:$0xff]
        %v673 = vld [vmem:[#allocation7 + $0x140] sm:$0xff]
        %v674 = vld [vmem:[#allocation7 + $0x148] sm:$0xff]
        %v675 = vld [vmem:[#allocation7 + $0x150] sm:$0xff]
        %v676 = vld [vmem:[#allocation7 + $0x158] sm:$0xff]
        %v677 = vld [vmem:[#allocation7 + $0x160] sm:$0xff]
        %v678 = vld [vmem:[#allocation7 + $0x168] sm:$0xff]
        %v679 = vld [vmem:[#allocation7 + $0x170] sm:$0xff]
        %v680 = vld [vmem:[#allocation7 + $0x178] sm:$0xff]
        %v681 = vld [vmem:[%s3] sm:$0x3f]
        %v683 = vlaneseq
        %v684 = vshrl.u32 %v683, 7
        %v685 = vsub.s32 0, %v684
        %v686 = vrot.slane %v681, %v685
        %v687 = vlaneseq
        %v688 = vshrl.u32 %v687, 7
        %v689 = vsub.s32 1, %v688
        %v690 = vrot.slane %v681, %v689
        %v691 = vlaneseq
        %v692 = vshrl.u32 %v691, 7
        %v693 = vsub.s32 2, %v692
        %v694 = vrot.slane %v681, %v693
        %v695 = vlaneseq
        %v696 = vshrl.u32 %v695, 7
        %v697 = vsub.s32 3, %v696
        %v698 = vrot.slane %v681, %v697
        %v699 = vlaneseq
        %v700 = vshrl.u32 %v699, 7
        %v701 = vsub.s32 4, %v700
        %v702 = vrot.slane %v681, %v701
        %v703 = vlaneseq
        %v704 = vshrl.u32 %v703, 7
        %v705 = vsub.s32 5, %v704
        %v706 = vrot.slane %v681, %v705
        %v761 = vunpack.c.l.b16 %v633
        %v762 = vunpack.c.h.b16 %v633
        %v763 = vunpack.c.l.b16 %v634
        %v764 = vunpack.c.h.b16 %v634
        %v765 = vunpack.c.l.b16 %v635
        %v766 = vunpack.c.h.b16 %v635
        %v767 = vunpack.c.l.b16 %v636
        %v768 = vunpack.c.h.b16 %v636
        %v769 = vunpack.c.l.b16 %v637
        %v770 = vunpack.c.h.b16 %v637
        %v771 = vunpack.c.l.b16 %v638
        %v772 = vunpack.c.h.b16 %v638
        %v773 = vunpack.c.l.b16 %v639
        %v774 = vunpack.c.h.b16 %v639
        %v775 = vunpack.c.l.b16 %v640
        %v776 = vunpack.c.h.b16 %v640
        %v777 = vunpack.c.l.b16 %v641
        %v778 = vunpack.c.h.b16 %v641
        %v779 = vunpack.c.l.b16 %v642
        %v780 = vunpack.c.h.b16 %v642
        %v781 = vunpack.c.l.b16 %v643
        %v782 = vunpack.c.h.b16 %v643
        %v783 = vunpack.c.l.b16 %v644
        %v784 = vunpack.c.h.b16 %v644
        %v785 = vunpack.c.l.b16 %v645
        %v786 = vunpack.c.h.b16 %v645
        %v787 = vunpack.c.l.b16 %v646
        %v788 = vunpack.c.h.b16 %v646
        %v789 = vunpack.c.l.b16 %v647
        %v790 = vunpack.c.h.b16 %v647
        %v791 = vunpack.c.l.b16 %v648
        %v792 = vunpack.c.h.b16 %v648
        %v793 = vunpack.c.l.b16 %v649
        %v794 = vunpack.c.h.b16 %v649
        %v795 = vunpack.c.l.b16 %v650
        %v796 = vunpack.c.h.b16 %v650
        %v797 = vunpack.c.l.b16 %v651
        %v798 = vunpack.c.h.b16 %v651
        %v799 = vunpack.c.l.b16 %v652
        %v800 = vunpack.c.h.b16 %v652
        %v801 = vunpack.c.l.b16 %v653
        %v802 = vunpack.c.h.b16 %v653
        %v803 = vunpack.c.l.b16 %v654
        %v804 = vunpack.c.h.b16 %v654
        %v805 = vunpack.c.l.b16 %v655
        %v806 = vunpack.c.h.b16 %v655
        %v807 = vunpack.c.l.b16 %v656
        %v808 = vunpack.c.h.b16 %v656
        %v809 = vunpack.c.l.b16 %v657
        %v810 = vunpack.c.h.b16 %v657
        %v811 = vunpack.c.l.b16 %v658
        %v812 = vunpack.c.h.b16 %v658
        %v813 = vunpack.c.l.b16 %v659
        %v814 = vunpack.c.h.b16 %v659
        %v815 = vunpack.c.l.b16 %v660
        %v816 = vunpack.c.h.b16 %v660
        %v817 = vunpack.c.l.b16 %v661
        %v818 = vunpack.c.h.b16 %v661
        %v819 = vunpack.c.l.b16 %v662
        %v820 = vunpack.c.h.b16 %v662
        %v821 = vunpack.c.l.b16 %v663
        %v822 = vunpack.c.h.b16 %v663
        %v823 = vunpack.c.l.b16 %v664
        %v824 = vunpack.c.h.b16 %v664
        %v825 = vunpack.c.l.b16 %v665
        %v826 = vunpack.c.h.b16 %v665
        %v827 = vunpack.c.l.b16 %v666
        %v828 = vunpack.c.h.b16 %v666
        %v829 = vunpack.c.l.b16 %v667
        %v830 = vunpack.c.h.b16 %v667
        %v831 = vunpack.c.l.b16 %v668
        %v832 = vunpack.c.h.b16 %v668
        %v833 = vunpack.c.l.b16 %v669
        %v834 = vunpack.c.h.b16 %v669
        %v835 = vunpack.c.l.b16 %v670
        %v836 = vunpack.c.h.b16 %v670
        %v837 = vunpack.c.l.b16 %v671
        %v838 = vunpack.c.h.b16 %v671
        %v839 = vunpack.c.l.b16 %v672
        %v840 = vunpack.c.h.b16 %v672
        %v841 = vunpack.c.l.b16 %v673
        %v842 = vunpack.c.h.b16 %v673
        %v843 = vunpack.c.l.b16 %v674
        %v844 = vunpack.c.h.b16 %v674
        %v845 = vunpack.c.l.b16 %v675
        %v846 = vunpack.c.h.b16 %v675
        %v847 = vunpack.c.l.b16 %v676
        %v848 = vunpack.c.h.b16 %v676
        %v849 = vunpack.c.l.b16 %v677
        %v850 = vunpack.c.h.b16 %v677
        %v851 = vunpack.c.l.b16 %v678
        %v852 = vunpack.c.h.b16 %v678
        %v853 = vunpack.c.l.b16 %v679
        %v854 = vunpack.c.h.b16 %v679
        %v855 = vunpack.c.l.b16 %v680
        %v856 = vunpack.c.h.b16 %v680
        %v857 = vpack.c.b16 %v767, %v761
        %v858 = vpack.c.b16 %v768, %v762
        %v859 = vpack.c.b16 %v769, %v763
        %v860 = vpack.c.b16 %v770, %v764
        %v861 = vpack.c.b16 %v771, %v765
        %v862 = vpack.c.b16 %v772, %v766
        %v863 = vpack.c.b16 %v779, %v773
        %v864 = vpack.c.b16 %v780, %v774
        %v865 = vpack.c.b16 %v781, %v775
        %v866 = vpack.c.b16 %v782, %v776
        %v867 = vpack.c.b16 %v783, %v777
        %v868 = vpack.c.b16 %v784, %v778
        %v869 = vpack.c.b16 %v791, %v785
        %v870 = vpack.c.b16 %v792, %v786
        %v871 = vpack.c.b16 %v793, %v787
        %v872 = vpack.c.b16 %v794, %v788
        %v873 = vpack.c.b16 %v795, %v789
        %v874 = vpack.c.b16 %v796, %v790
        %v875 = vpack.c.b16 %v803, %v797
        %v876 = vpack.c.b16 %v804, %v798
        %v877 = vpack.c.b16 %v805, %v799
        %v878 = vpack.c.b16 %v806, %v800
        %v879 = vpack.c.b16 %v807, %v801
        %v880 = vpack.c.b16 %v808, %v802
        %v881 = vpack.c.b16 %v815, %v809
        %v882 = vpack.c.b16 %v816, %v810
        %v883 = vpack.c.b16 %v817, %v811
        %v884 = vpack.c.b16 %v818, %v812
        %v885 = vpack.c.b16 %v819, %v813
        %v886 = vpack.c.b16 %v820, %v814
        %v887 = vpack.c.b16 %v827, %v821
        %v888 = vpack.c.b16 %v828, %v822
        %v889 = vpack.c.b16 %v829, %v823
        %v890 = vpack.c.b16 %v830, %v824
        %v891 = vpack.c.b16 %v831, %v825
        %v892 = vpack.c.b16 %v832, %v826
        %v893 = vpack.c.b16 %v839, %v833
        %v894 = vpack.c.b16 %v840, %v834
        %v895 = vpack.c.b16 %v841, %v835
        %v896 = vpack.c.b16 %v842, %v836
        %v897 = vpack.c.b16 %v843, %v837
        %v898 = vpack.c.b16 %v844, %v838
        %v899 = vpack.c.b16 %v851, %v845
        %v900 = vpack.c.b16 %v852, %v846
        %v901 = vpack.c.b16 %v853, %v847
        %v902 = vpack.c.b16 %v854, %v848
        %v903 = vpack.c.b16 %v855, %v849
        %v904 = vpack.c.b16 %v856, %v850
        %953 = vmatprep.subr.bf16.mxu0 %v858
        %954 = vmatpush1.bf16.msra.mxu0 %v857
        %955 = vmatprep.subr.bf16.mxu0 %v864
        %956 = vmatpush1.bf16.msra.mxu0 %v863
        %957 = vmatprep.subr.bf16.mxu0 %v870
        %958 = vmatpush1.bf16.msra.mxu0 %v869
        %959 = vmatprep.subr.bf16.mxu0 %v876
        %960 = vmatpush1.bf16.msra.mxu0 %v875
        %961 = vmatprep.subr.bf16.mxu0 %v882
        %962 = vmatpush1.bf16.msra.mxu0 %v881
        %963 = vmatprep.subr.bf16.mxu0 %v888
        %964 = vmatpush1.bf16.msra.mxu0 %v887
        %965 = vmatprep.subr.bf16.mxu0 %v894
        %966 = vmatpush1.bf16.msra.mxu0 %v893
        %967 = vmatprep.subr.bf16.mxu0 %v900
        %968 = vmatpush1.bf16.msra.mxu0 %v899
        %969 = vmatprep.subr.bf16.mxu0 0
        %970 = vmatpush1.bf16.msra.mxu0 0
        %971 = vmatprep.subr.bf16.mxu0 0
        %972 = vmatpush1.bf16.msra.mxu0 0
        %973 = vmatprep.subr.bf16.mxu0 0
        %974 = vmatpush1.bf16.msra.mxu0 0
        %975 = vmatprep.subr.bf16.mxu0 0
        %976 = vmatpush1.bf16.msra.mxu0 0
        %977 = vmatprep.subr.bf16.mxu0 0
        %978 = vmatpush1.bf16.msra.mxu0 0
        %979 = vmatprep.subr.bf16.mxu0 0
        %980 = vmatpush1.bf16.msra.mxu0 0
        %981 = vmatprep.subr.bf16.mxu0 0
        %982 = vmatpush1.bf16.msra.mxu0 0
        %983 = vmatprep.subr.bf16.mxu0 0
        %984 = vmatpush1.bf16.msra.mxu0 0
        %985 = vmatprep.mubr.bf16.mxu0 0
        %986 = vmatmul.mubr.bf16.gmra.mrb[0].mxu0 %v632
        %v987 = vpop.f32.mrb[0].mxu0
        %v988 = vadd.f32 %v686, %v987
        %v989 = vpop.f32.mrb[0].mxu0
        %v990 = vadd.f32 %v690, %v989
        %v991 = vpop.f32.mrb[0].mxu0
        %v992 = vpop.f32.mrb[0].mxu0
        %993 = vdwg.mxu0
        %994 = vmatprep.subr.bf16.mxu0 %v860
        %995 = vmatpush1.bf16.msra.mxu0 %v859
        %996 = vmatprep.subr.bf16.mxu0 %v866
        %997 = vmatpush1.bf16.msra.mxu0 %v865
        %998 = vmatprep.subr.bf16.mxu0 %v872
        %999 = vmatpush1.bf16.msra.mxu0 %v871
        %1000 = vmatprep.subr.bf16.mxu0 %v878
        %1001 = vmatpush1.bf16.msra.mxu0 %v877
        %1002 = vmatprep.subr.bf16.mxu0 %v884
        %1003 = vmatpush1.bf16.msra.mxu0 %v883
        %1004 = vmatprep.subr.bf16.mxu0 %v890
        %1005 = vmatpush1.bf16.msra.mxu0 %v889
        %1006 = vmatprep.subr.bf16.mxu0 %v896
        %1007 = vmatpush1.bf16.msra.mxu0 %v895
        %1008 = vmatprep.subr.bf16.mxu0 %v902
        %1009 = vmatpush1.bf16.msra.mxu0 %v901
        %1010 = vmatprep.subr.bf16.mxu0 0
        %1011 = vmatpush1.bf16.msra.mxu0 0
        %1012 = vmatprep.subr.bf16.mxu0 0
        %1013 = vmatpush1.bf16.msra.mxu0 0
        %1014 = vmatprep.subr.bf16.mxu0 0
        %1015 = vmatpush1.bf16.msra.mxu0 0
        %1016 = vmatprep.subr.bf16.mxu0 0
        %1017 = vmatpush1.bf16.msra.mxu0 0
        %1018 = vmatprep.subr.bf16.mxu0 0
        %1019 = vmatpush1.bf16.msra.mxu0 0
        %1020 = vmatprep.subr.bf16.mxu0 0
        %1021 = vmatpush1.bf16.msra.mxu0 0
        %1022 = vmatprep.subr.bf16.mxu0 0
        %1023 = vmatpush1.bf16.msra.mxu0 0
        %1024 = vmatprep.subr.bf16.mxu0 0
        %1025 = vmatpush1.bf16.msra.mxu0 0
        %1026 = vmatprep.mubr.bf16.mxu0 0
        %1027 = vmatmul.mubr.bf16.gmra.mrb[0].mxu0 %v632
        %v1028 = vpop.f32.mrb[0].mxu0
        %v1029 = vadd.f32 %v694, %v1028
        %v1030 = vpop.f32.mrb[0].mxu0
        %v1031 = vadd.f32 %v698, %v1030
        %v1032 = vpop.f32.mrb[0].mxu0
        %v1033 = vpop.f32.mrb[0].mxu0
        %1034 = vdwg.mxu0
        %1035 = vmatprep.subr.bf16.mxu0 %v862
        %1036 = vmatpush1.bf16.msra.mxu0 %v861
        %1037 = vmatprep.subr.bf16.mxu0 %v868
        %1038 = vmatpush1.bf16.msra.mxu0 %v867
        %1039 = vmatprep.subr.bf16.mxu0 %v874
        %1040 = vmatpush1.bf16.msra.mxu0 %v873
        %1041 = vmatprep.subr.bf16.mxu0 %v880
        %1042 = vmatpush1.bf16.msra.mxu0 %v879
        %1043 = vmatprep.subr.bf16.mxu0 %v886
        %1044 = vmatpush1.bf16.msra.mxu0 %v885
        %1045 = vmatprep.subr.bf16.mxu0 %v892
        %1046 = vmatpush1.bf16.msra.mxu0 %v891
        %1047 = vmatprep.subr.bf16.mxu0 %v898
        %1048 = vmatpush1.bf16.msra.mxu0 %v897
        %1049 = vmatprep.subr.bf16.mxu0 %v904
        %1050 = vmatpush1.bf16.msra.mxu0 %v903
        %1051 = vmatprep.subr.bf16.mxu0 0
        %1052 = vmatpush1.bf16.msra.mxu0 0
        %1053 = vmatprep.subr.bf16.mxu0 0
        %1054 = vmatpush1.bf16.msra.mxu0 0
        %1055 = vmatprep.subr.bf16.mxu0 0
        %1056 = vmatpush1.bf16.msra.mxu0 0
        %1057 = vmatprep.subr.bf16.mxu0 0
        %1058 = vmatpush1.bf16.msra.mxu0 0
        %1059 = vmatprep.subr.bf16.mxu0 0
        %1060 = vmatpush1.bf16.msra.mxu0 0
        %1061 = vmatprep.subr.bf16.mxu0 0
        %1062 = vmatpush1.bf16.msra.mxu0 0
        %1063 = vmatprep.subr.bf16.mxu0 0
        %1064 = vmatpush1.bf16.msra.mxu0 0
        %1065 = vmatprep.subr.bf16.mxu0 0
        %1066 = vmatpush1.bf16.msra.mxu0 0
        %1067 = vmatprep.mubr.bf16.mxu0 0
        %1068 = vmatmul.mubr.bf16.gmra.mrb[0].mxu0 %v632
        %v1069 = vpop.f32.mrb[0].mxu0
        %v1070 = vadd.f32 %v702, %v1069
        %v1071 = vpop.f32.mrb[0].mxu0
        %v1072 = vadd.f32 %v706, %v1071
        %v1073 = vpop.f32.mrb[0].mxu0
        %v1074 = vpop.f32.mrb[0].mxu0
        %1075 = vdwg.mxu0
        %v1076 = vpack.c.bf16 %v988, %v988
        %v1077 = vpack.c.bf16 %v1029, %v1029
        %1078 = vmatprep.subr.bf16.mxu0 0
        %1079 = vmatpush1.bf16.xpose.msra.mxu0 %v1077
        %1080 = vmatprep.subr.bf16.mxu0 0
        %1081 = vmatpush1.bf16.xpose.msra.mxu0 0
        %1082 = vmatprep.subr.bf16.mxu0 0
        %1083 = vmatpush1.bf16.xpose.msra.mxu0 0
        %1084 = vmatprep.subr.bf16.mxu0 0
        %1085 = vmatpush1.bf16.xpose.msra.mxu0 0
        %1086 = vmatprep.subr.bf16.mxu0 0
        %1087 = vmatpush1.bf16.xpose.msra.mxu0 0
        %1088 = vmatprep.subr.bf16.mxu0 0
        %1089 = vmatpush1.bf16.xpose.msra.mxu0 0
        %1090 = vmatprep.subr.bf16.mxu0 0
        %1091 = vmatpush1.bf16.xpose.msra.mxu0 0
        %1092 = vmatprep.subr.bf16.mxu0 0
        %1093 = vmatpush1.bf16.xpose.msra.mxu0 0
        %1094 = vmatprep.subr.bf16.mxu0 0
        %1095 = vmatpush1.bf16.xpose.msra.mxu0 0
        %1096 = vmatprep.subr.bf16.mxu0 0
        %1097 = vmatpush1.bf16.xpose.msra.mxu0 0
        %1098 = vmatprep.subr.bf16.mxu0 0
        %1099 = vmatpush1.bf16.xpose.msra.mxu0 0
        %1100 = vmatprep.subr.bf16.mxu0 0
        %1101 = vmatpush1.bf16.xpose.msra.mxu0 0
        %1102 = vmatprep.subr.bf16.mxu0 0
        %1103 = vmatpush1.bf16.xpose.msra.mxu0 0
        %1104 = vmatprep.subr.bf16.mxu0 0
        %1105 = vmatpush1.bf16.xpose.msra.mxu0 0
        %1106 = vmatprep.subr.bf16.mxu0 0
        %1107 = vmatpush1.bf16.xpose.msra.mxu0 0
        %1108 = vmatprep.subr.bf16.mxu0 0
        %1109 = vmatpush1.bf16.xpose.msra.mxu0 0
        %1110 = vmatprep.mubr.bf16.mxu0 0
        %1111 = vmatmul.mubr.bf16.gmra.mrb[0].mxu0 %v1076
        %v1112 = vpop.f32.mrb[0].mxu0
        %v1113 = vadd.f32 %v630, %v1112
        %v1114 = vpop.f32.mrb[0].mxu0
        %v1115 = vpop.f32.mrb[0].mxu0
        %v1116 = vpop.f32.mrb[0].mxu0
        %1117 = vdwg.mxu0
        %vm1118 = vcmask 64512
        %v1119 = vsel %vm1118, %v1113, -inf
        %1120 = vmax.xlane.f32.xlu0 %v1119
        %v1121 = vpop.xlane.xlu0 %1120
        %v1122 = vsub.f32 %v1113, %v1121
        %v1123 = vmul.f32 %v1122, 1.442695
        %v1124 = vpow.pop %v1123
        %v1125 = vsel %vm1118, %v1124, 0.0
        %1126 = vadd.xlane.f32.xlu0 %v1125
        %v1127 = vpop.xlane.xlu0 %1126
        %v1128 = vrcp.pop %v1127
        %v1129 = vmul.f32 %v1124, %v1128
        %v1130 = vpack.c.bf16 %v1129, %v1129
        %v1131 = vpack.c.bf16 %v1070, %v1070
        %v1133 = vsel %vm1118, %v1130, 0
        %vm1135 = vcmask 1043456
        %v1137 = vsel %vm1135, %v1131, 0
        %1139 = vmatprep.subr.bf16.mxu0 0
        %1140 = vmatpush1.bf16.msra.mxu0 %v1137
        %1141 = vmatprep.subr.bf16.mxu0 0
        %1142 = vmatpush1.bf16.msra.mxu0 0
        %1143 = vmatprep.subr.bf16.mxu0 0
        %1144 = vmatpush1.bf16.msra.mxu0 0
        %1145 = vmatprep.subr.bf16.mxu0 0
        %1146 = vmatpush1.bf16.msra.mxu0 0
        %1147 = vmatprep.subr.bf16.mxu0 0
        %1148 = vmatpush1.bf16.msra.mxu0 0
        %1149 = vmatprep.subr.bf16.mxu0 0
        %1150 = vmatpush1.bf16.msra.mxu0 0
        %1151 = vmatprep.subr.bf16.mxu0 0
        %1152 = vmatpush1.bf16.msra.mxu0 0
        %1153 = vmatprep.subr.bf16.mxu0 0
        %1154 = vmatpush1.bf16.msra.mxu0 0
        %1155 = vmatprep.subr.bf16.mxu0 0
        %1156 = vmatpush1.bf16.msra.mxu0 0
        %1157 = vmatprep.subr.bf16.mxu0 0
        %1158 = vmatpush1.bf16.msra.mxu0 0
        %1159 = vmatprep.subr.bf16.mxu0 0
        %1160 = vmatpush1.bf16.msra.mxu0 0
        %1161 = vmatprep.subr.bf16.mxu0 0
        %1162 = vmatpush1.bf16.msra.mxu0 0
        %1163 = vmatprep.subr.bf16.mxu0 0
        %1164 = vmatpush1.bf16.msra.mxu0 0
        %1165 = vmatprep.subr.bf16.mxu0 0
        %1166 = vmatpush1.bf16.msra.mxu0 0
        %1167 = vmatprep.subr.bf16.mxu0 0
        %1168 = vmatpush1.bf16.msra.mxu0 0
        %1169 = vmatprep.subr.bf16.mxu0 0
        %1170 = vmatpush1.bf16.msra.mxu0 0
        %1171 = vmatprep.mubr.bf16.mxu0 0
        %1172 = vmatmul.mubr.bf16.gmra.mrb[0].mxu0 %v1133
        %v1173 = vpop.f32.mrb[0].mxu0
        %v1174 = vadd.f32 0.0, %v1173
        %v1175 = vpop.f32.mrb[0].mxu0
        %v1176 = vpop.f32.mrb[0].mxu0
        %v1177 = vpop.f32.mrb[0].mxu0
        %1178 = vdwg.mxu0
        %v1179 = vpack.c.bf16 %v990, %v990
        %v1180 = vpack.c.bf16 %v1031, %v1031
        %1181 = vmatprep.subr.bf16.mxu0 0
        %1182 = vmatpush1.bf16.xpose.msra.mxu0 %v1180
        %1183 = vmatprep.subr.bf16.mxu0 0
        %1184 = vmatpush1.bf16.xpose.msra.mxu0 0
        %1185 = vmatprep.subr.bf16.mxu0 0
        %1186 = vmatpush1.bf16.xpose.msra.mxu0 0
        %1187 = vmatprep.subr.bf16.mxu0 0
        %1188 = vmatpush1.bf16.xpose.msra.mxu0 0
        %1189 = vmatprep.subr.bf16.mxu0 0
        %1190 = vmatpush1.bf16.xpose.msra.mxu0 0
        %1191 = vmatprep.subr.bf16.mxu0 0
        %1192 = vmatpush1.bf16.xpose.msra.mxu0 0
        %1193 = vmatprep.subr.bf16.mxu0 0
        %1194 = vmatpush1.bf16.xpose.msra.mxu0 0
        %1195 = vmatprep.subr.bf16.mxu0 0
        %1196 = vmatpush1.bf16.xpose.msra.mxu0 0
        %1197 = vmatprep.subr.bf16.mxu0 0
        %1198 = vmatpush1.bf16.xpose.msra.mxu0 0
        %1199 = vmatprep.subr.bf16.mxu0 0
        %1200 = vmatpush1.bf16.xpose.msra.mxu0 0
        %1201 = vmatprep.subr.bf16.mxu0 0
        %1202 = vmatpush1.bf16.xpose.msra.mxu0 0
        %1203 = vmatprep.subr.bf16.mxu0 0
        %1204 = vmatpush1.bf16.xpose.msra.mxu0 0
        %1205 = vmatprep.subr.bf16.mxu0 0
        %1206 = vmatpush1.bf16.xpose.msra.mxu0 0
        %1207 = vmatprep.subr.bf16.mxu0 0
        %1208 = vmatpush1.bf16.xpose.msra.mxu0 0
        %1209 = vmatprep.subr.bf16.mxu0 0
        %1210 = vmatpush1.bf16.xpose.msra.mxu0 0
        %1211 = vmatprep.subr.bf16.mxu0 0
        %1212 = vmatpush1.bf16.xpose.msra.mxu0 0
        %1213 = vmatprep.mubr.bf16.mxu0 0
        %1214 = vmatmul.mubr.bf16.gmra.mrb[0].mxu0 %v1179
        %v1215 = vpop.f32.mrb[0].mxu0
        %v1216 = vadd.f32 %v630, %v1215
        %v1217 = vpop.f32.mrb[0].mxu0
        %v1218 = vpop.f32.mrb[0].mxu0
        %v1219 = vpop.f32.mrb[0].mxu0
        %1220 = vdwg.mxu0
        %v1221 = vsel %vm1118, %v1216, -inf
        %1222 = vmax.xlane.f32.xlu0 %v1221
        %v1223 = vpop.xlane.xlu0 %1222
        %v1224 = vsub.f32 %v1216, %v1223
        %v1225 = vmul.f32 %v1224, 1.442695
        %v1226 = vpow.pop %v1225
        %v1227 = vsel %vm1118, %v1226, 0.0
        %1228 = vadd.xlane.f32.xlu0 %v1227
        %v1229 = vpop.xlane.xlu0 %1228
        %v1230 = vrcp.pop %v1229
        %v1231 = vmul.f32 %v1226, %v1230
        %v1232 = vpack.c.bf16 %v1231, %v1231
        %v1233 = vpack.c.bf16 %v1072, %v1072
        %v1235 = vsel %vm1118, %v1232, 0
        %v1238 = vsel %vm1135, %v1233, 0
        %1240 = vmatprep.subr.bf16.mxu0 0
        %1241 = vmatpush1.bf16.msra.mxu0 %v1238
        %1242 = vmatprep.subr.bf16.mxu0 0
        %1243 = vmatpush1.bf16.msra.mxu0 0
        %1244 = vmatprep.subr.bf16.mxu0 0
        %1245 = vmatpush1.bf16.msra.mxu0 0
        %1246 = vmatprep.subr.bf16.mxu0 0
        %1247 = vmatpush1.bf16.msra.mxu0 0
        %1248 = vmatprep.subr.bf16.mxu0 0
        %1249 = vmatpush1.bf16.msra.mxu0 0
        %1250 = vmatprep.subr.bf16.mxu0 0
        %1251 = vmatpush1.bf16.msra.mxu0 0
        %1252 = vmatprep.subr.bf16.mxu0 0
        %1253 = vmatpush1.bf16.msra.mxu0 0
        %1254 = vmatprep.subr.bf16.mxu0 0
        %1255 = vmatpush1.bf16.msra.mxu0 0
        %1256 = vmatprep.subr.bf16.mxu0 0
        %1257 = vmatpush1.bf16.msra.mxu0 0
        %1258 = vmatprep.subr.bf16.mxu0 0
        %1259 = vmatpush1.bf16.msra.mxu0 0
        %1260 = vmatprep.subr.bf16.mxu0 0
        %1261 = vmatpush1.bf16.msra.mxu0 0
        %1262 = vmatprep.subr.bf16.mxu0 0
        %1263 = vmatpush1.bf16.msra.mxu0 0
        %1264 = vmatprep.subr.bf16.mxu0 0
        %1265 = vmatpush1.bf16.msra.mxu0 0
        %1266 = vmatprep.subr.bf16.mxu0 0
        %1267 = vmatpush1.bf16.msra.mxu0 0
        %1268 = vmatprep.subr.bf16.mxu0 0
        %1269 = vmatpush1.bf16.msra.mxu0 0
        %1270 = vmatprep.subr.bf16.mxu0 0
        %1271 = vmatpush1.bf16.msra.mxu0 0
        %1272 = vmatprep.mubr.bf16.mxu0 0
        %1273 = vmatmul.mubr.bf16.gmra.mrb[0].mxu0 %v1235
        %v1274 = vpop.f32.mrb[0].mxu0
        %v1275 = vadd.f32 0.0, %v1274
        %v1276 = vpop.f32.mrb[0].mxu0
        %v1277 = vpop.f32.mrb[0].mxu0
        %v1278 = vpop.f32.mrb[0].mxu0
        %1279 = vdwg.mxu0
        %v1280 = vpack.c.bf16 %v1174, %v1174
        %v1281 = vpack.c.bf16 %v1275, %v1275
        %v1282 = vld [vmem:[#allocation9] sm:$0xf]
        %v1283 = vld [vmem:[#allocation9 + $0x4] sm:$0xf]
        %v1284 = vld [vmem:[#allocation9 + $0x8] sm:$0xf]
        %v1285 = vld [vmem:[#allocation9 + $0xc] sm:$0xf]
        %v1286 = vld [vmem:[#allocation9 + $0x10] sm:$0xf]
        %v1287 = vld [vmem:[#allocation9 + $0x14] sm:$0xf]
        %v1288 = vld [vmem:[#allocation9 + $0x18] sm:$0xf]
        %v1289 = vld [vmem:[#allocation9 + $0x1c] sm:$0xf]
        %v1290 = vld [vmem:[#allocation9 + $0x20] sm:$0xf]
        %v1291 = vld [vmem:[#allocation9 + $0x24] sm:$0xf]
        %v1292 = vld [vmem:[#allocation9 + $0x28] sm:$0xf]
        %v1293 = vld [vmem:[#allocation9 + $0x2c] sm:$0xf]
        %v1294 = vld [vmem:[#allocation9 + $0x30] sm:$0xf]
        %v1295 = vld [vmem:[#allocation9 + $0x34] sm:$0xf]
        %v1296 = vld [vmem:[#allocation9 + $0x38] sm:$0xf]
        %v1297 = vld [vmem:[#allocation9 + $0x3c] sm:$0xf]
        %v1298 = vld [vmem:[#allocation9 + $0x40] sm:$0xf]
        %v1299 = vld [vmem:[#allocation9 + $0x44] sm:$0xf]
        %v1300 = vld [vmem:[#allocation9 + $0x48] sm:$0xf]
        %v1301 = vld [vmem:[#allocation9 + $0x4c] sm:$0xf]
        %v1302 = vld [vmem:[#allocation9 + $0x50] sm:$0xf]
        %v1303 = vld [vmem:[#allocation9 + $0x54] sm:$0xf]
        %v1304 = vld [vmem:[#allocation9 + $0x58] sm:$0xf]
        %v1305 = vld [vmem:[#allocation9 + $0x5c] sm:$0xf]
        %v1306 = vld [vmem:[#allocation9 + $0x60] sm:$0xf]
        %v1307 = vld [vmem:[#allocation9 + $0x64] sm:$0xf]
        %v1308 = vld [vmem:[#allocation9 + $0x68] sm:$0xf]
        %v1309 = vld [vmem:[#allocation9 + $0x6c] sm:$0xf]
        %v1310 = vld [vmem:[#allocation9 + $0x70] sm:$0xf]
        %v1311 = vld [vmem:[#allocation9 + $0x74] sm:$0xf]
        %v1312 = vld [vmem:[#allocation9 + $0x78] sm:$0xf]
        %v1313 = vld [vmem:[#allocation9 + $0x7c] sm:$0xf]
        %v1314 = vld [vmem:[%s5] sm:$0x1]
        %v1316 = vlaneseq
        %v1317 = vshrl.u32 %v1316, 7
        %v1318 = vsub.s32 0, %v1317
        %v1319 = vrot.slane %v1314, %v1318
        %v1353 = vunpack.c.l.b16 %v1282
        %v1354 = vunpack.c.l.b16 %v1283
        %v1355 = vunpack.c.l.b16 %v1284
        %v1356 = vunpack.c.l.b16 %v1285
        %v1357 = vunpack.c.l.b16 %v1286
        %v1358 = vunpack.c.l.b16 %v1287
        %v1359 = vunpack.c.l.b16 %v1288
        %v1360 = vunpack.c.l.b16 %v1289
        %v1361 = vunpack.c.l.b16 %v1290
        %v1362 = vunpack.c.l.b16 %v1291
        %v1363 = vunpack.c.l.b16 %v1292
        %v1364 = vunpack.c.l.b16 %v1293
        %v1365 = vunpack.c.l.b16 %v1294
        %v1366 = vunpack.c.l.b16 %v1295
        %v1367 = vunpack.c.l.b16 %v1296
        %v1368 = vunpack.c.l.b16 %v1297
        %v1369 = vunpack.c.l.b16 %v1298
        %v1370 = vunpack.c.l.b16 %v1299
        %v1371 = vunpack.c.l.b16 %v1300
        %v1372 = vunpack.c.l.b16 %v1301
        %v1373 = vunpack.c.l.b16 %v1302
        %v1374 = vunpack.c.l.b16 %v1303
        %v1375 = vunpack.c.l.b16 %v1304
        %v1376 = vunpack.c.l.b16 %v1305
        %v1377 = vunpack.c.l.b16 %v1306
        %v1378 = vunpack.c.l.b16 %v1307
        %v1379 = vunpack.c.l.b16 %v1308
        %v1380 = vunpack.c.l.b16 %v1309
        %v1381 = vunpack.c.l.b16 %v1310
        %v1382 = vunpack.c.l.b16 %v1311
        %v1383 = vunpack.c.l.b16 %v1312
        %v1384 = vunpack.c.l.b16 %v1313
        %v1385 = vpack.c.b16 %v1354, %v1353
        %v1386 = vpack.c.b16 %v1356, %v1355
        %v1387 = vpack.c.b16 %v1358, %v1357
        %v1388 = vpack.c.b16 %v1360, %v1359
        %v1389 = vpack.c.b16 %v1362, %v1361
        %v1390 = vpack.c.b16 %v1364, %v1363
        %v1391 = vpack.c.b16 %v1366, %v1365
        %v1392 = vpack.c.b16 %v1368, %v1367
        %v1393 = vpack.c.b16 %v1370, %v1369
        %v1394 = vpack.c.b16 %v1372, %v1371
        %v1395 = vpack.c.b16 %v1374, %v1373
        %v1396 = vpack.c.b16 %v1376, %v1375
        %v1397 = vpack.c.b16 %v1378, %v1377
        %v1398 = vpack.c.b16 %v1380, %v1379
        %v1399 = vpack.c.b16 %v1382, %v1381
        %v1400 = vpack.c.b16 %v1384, %v1383
        %1417 = vmatprep.subr.bf16.mxu0 0
        %1418 = vmatpush1.bf16.msra.mxu0 %v1385
        %1419 = vmatprep.subr.bf16.mxu0 0
        %1420 = vmatpush1.bf16.msra.mxu0 %v1386
        %1421 = vmatprep.subr.bf16.mxu0 0
        %1422 = vmatpush1.bf16.msra.mxu0 %v1387
        %1423 = vmatprep.subr.bf16.mxu0 0
        %1424 = vmatpush1.bf16.msra.mxu0 %v1388
        %1425 = vmatprep.subr.bf16.mxu0 0
        %1426 = vmatpush1.bf16.msra.mxu0 %v1389
        %1427 = vmatprep.subr.bf16.mxu0 0
        %1428 = vmatpush1.bf16.msra.mxu0 %v1390
        %1429 = vmatprep.subr.bf16.mxu0 0
        %1430 = vmatpush1.bf16.msra.mxu0 %v1391
        %1431 = vmatprep.subr.bf16.mxu0 0
        %1432 = vmatpush1.bf16.msra.mxu0 %v1392
        %1433 = vmatprep.subr.bf16.mxu0 0
        %1434 = vmatpush1.bf16.msra.mxu0 %v1393
        %1435 = vmatprep.subr.bf16.mxu0 0
        %1436 = vmatpush1.bf16.msra.mxu0 %v1394
        %1437 = vmatprep.subr.bf16.mxu0 0
        %1438 = vmatpush1.bf16.msra.mxu0 %v1395
        %1439 = vmatprep.subr.bf16.mxu0 0
        %1440 = vmatpush1.bf16.msra.mxu0 %v1396
        %1441 = vmatprep.subr.bf16.mxu0 0
        %1442 = vmatpush1.bf16.msra.mxu0 %v1397
        %1443 = vmatprep.subr.bf16.mxu0 0
        %1444 = vmatpush1.bf16.msra.mxu0 %v1398
        %1445 = vmatprep.subr.bf16.mxu0 0
        %1446 = vmatpush1.bf16.msra.mxu0 %v1399
        %1447 = vmatprep.subr.bf16.mxu0 0
        %1448 = vmatpush1.bf16.msra.mxu0 %v1400
        %1449 = vmatprep.mubr.bf16.mxu0 %v1281
        %1450 = vmatmul.mubr.bf16.gmra.mrb[0].mxu0 %v1280
        %v1451 = vpop.f32.mrb[0].mxu0
        %v1452 = vadd.f32 %v1319, %v1451
        %v1453 = vpop.f32.mrb[0].mxu0
        %v1454 = vpop.f32.mrb[0].mxu0
        %v1455 = vpop.f32.mrb[0].mxu0
        %1456 = vdwg.mxu0
        %v1457 = vadd.s32 %v622, 8
        %vm1458 = vcmp.lt.s32.totalorder %v1457, 7
        %v1459 = vsel %vm1458, %v1457, 7
        %s1460 = ssub.s32 %s618, 1
        %v1461 = vstv %s1460
        %vm1462 = vcmp.lt.s32.totalorder %v1459, %v1461
        %v1463 = vsel %vm1462, %v1459, %v1461
        %v1464 = vsub.s32 %v622, 8
        %vm1465 = vcmp.gt.s32.totalorder %v1464, 0
        %v1466 = vsel %vm1465, %v1464, 0
        %v1467 = vsub.s32 %v1463, %v1466
        %v1468 = vadd.s32 %v1467, 1
        %v1469 = vcvt.s32.f32 %v1468
        %v1470 = vmax.f32 %v1469, 1.0
        %v1471 = vrcp.pop %v1470
        %p1472 = scmp.gt.s32.totalorder %s618, 1
        %s1473 = scalar_select %p1472, %s618, 1
        %s1474 = scvt.s32.f32 %s1473
        %v1475 = vstv %s1474
        %v1476 = vrcp.pop %v1475
        %s1477 = vtos %v1476
        %v1478 = vadd.f32 %v631, %v1452
        %v1479 = vmul.f32 %v1478, %v628
        %v1480 = vrot.slane %v1479, 4
        %v1481 = vadd.f32 %v1479, %v1480
        %v1482 = vrot.slane %v1481, 2
        %v1483 = vadd.f32 %v1481, %v1482
        %v1484 = vrot.slane %v1483, 1
        %v1485 = vadd.f32 %v1483, %v1484
        %v1486 = vstv %s1477
        %v1487 = vmul.f32 %v1485, %v1486
        %v1488 = vsub.f32 %v1478, %v1487
        %v1489 = vmul.f32 %v1488, %v628
        %v1490 = vmul.f32 %v1489, %v1489
        %vm1494 = vcmask 1046528
        %v1495 = vrot.slane 0.0, 1
        %v1496 = vrot.slane %v1489, 1
        %v1497 = vsel %vm1494, %v1495, %v1496
        %v1498 = vrot.slane %v1490, 1
        %v1499 = vsel %vm1494, %v1495, %v1498
        %v1500 = vsel %vm1494, %v1496, %v1495
        %v1501 = vsel %vm1494, %v1498, %v1495
        %v1507 = vsel %vm1494, %v1495, 0.0
        %v1508 = vadd.f32 %v1497, 0.0
        %v1509 = vadd.f32 %v1499, 0.0
        %v1510 = vadd.f32 %v1489, %v1500
        %v1511 = vadd.f32 %v1490, %v1501
        %v1512 = vadd.f32 %v1507, 0.0
        %vm1518 = vcmask 1045504
        %v1519 = vrot.slane %v1508, 2
        %v1520 = vrot.slane %v1510, 2
        %v1521 = vsel %vm1518, %v1519, %v1520
        %v1522 = vrot.slane %v1509, 2
        %v1523 = vrot.slane %v1511, 2
        %v1524 = vsel %vm1518, %v1522, %v1523
        %v1525 = vrot.slane %v1512, 2
        %v1526 = vsel %vm1518, %v1520, %v1525
        %v1527 = vsel %vm1518, %v1523, %v1525
        %v1533 = vsel %vm1518, %v1525, 0.0
        %v1534 = vadd.f32 %v1508, %v1521
        %v1535 = vadd.f32 %v1509, %v1524
        %v1536 = vadd.f32 %v1510, %v1526
        %v1537 = vadd.f32 %v1511, %v1527
        %v1538 = vadd.f32 %v1512, %v1533
        %v1544 = vrot.slane %v1534, 4
        %v1545 = vrot.slane %v1536, 4
        %v1546 = vsel %vm1135, %v1544, %v1545
        %v1547 = vrot.slane %v1535, 4
        %v1548 = vrot.slane %v1537, 4
        %v1549 = vsel %vm1135, %v1547, %v1548
        %v1550 = vrot.slane %v1538, 4
        %v1551 = vsel %vm1135, %v1545, %v1550
        %v1552 = vsel %vm1135, %v1548, %v1550
        %v1557 = vadd.f32 %v1534, %v1546
        %v1558 = vadd.f32 %v1535, %v1549
        %v1559 = vadd.f32 %v1536, %v1551
        %v1560 = vadd.f32 %v1537, %v1552
        %v1561 = vadd.f32 %v1557, %v1559
        %v1562 = vadd.f32 %v1558, %v1560
        %v1563 = vadd.f32 %v1561, 0.0
        %v1564 = vadd.f32 %v1562, 0.0
        %v1565 = vmul.f32 %v1563, %v1471
        %v1566 = vmul.f32 %v1564, %v1471
        %v1567 = vmul.f32 %v1565, %v1565
        %v1568 = vsub.f32 %v1566, %v1567
        %v1569 = vmax.f32 %v1568, 0.0
        %v1570 = vsub.f32 %v1488, %v1565
        %v1571 = vadd.f32 %v1569, 1e-05
        %v1572 = vrsqrt.pop %v1571
        %v1573 = vmul.f32 %v1570, %v1572
        %v1574 = vld [vmem:[#allocation10] sm:$0xff]
        %v1575 = vld [vmem:[#allocation10 + $0x8] sm:$0xff]
        %v1576 = vld [vmem:[#allocation10 + $0x10] sm:$0xff]
        %v1577 = vld [vmem:[#allocation10 + $0x18] sm:$0xff]
        %v1578 = vld [vmem:[#allocation10 + $0x20] sm:$0xff]
        %v1579 = vld [vmem:[#allocation10 + $0x28] sm:$0xff]
        %v1580 = vld [vmem:[#allocation10 + $0x30] sm:$0xff]
        %v1581 = vld [vmem:[#allocation10 + $0x38] sm:$0xff]
        %v1582 = vld [vmem:[#allocation10 + $0x40] sm:$0xff]
        %v1583 = vld [vmem:[#allocation10 + $0x48] sm:$0xff]
        %v1584 = vld [vmem:[#allocation10 + $0x50] sm:$0xff]
        %v1585 = vld [vmem:[#allocation10 + $0x58] sm:$0xff]
        %v1586 = vld [vmem:[#allocation10 + $0x60] sm:$0xff]
        %v1587 = vld [vmem:[#allocation10 + $0x68] sm:$0xff]
        %v1588 = vld [vmem:[#allocation10 + $0x70] sm:$0xff]
        %v1589 = vld [vmem:[#allocation10 + $0x78] sm:$0xff]
        %v1590 = vld [vmem:[%s7] sm:$0x3]
        %v1592 = vlaneseq
        %v1593 = vshrl.u32 %v1592, 7
        %v1594 = vsub.s32 0, %v1593
        %v1595 = vrot.slane %v1590, %v1594
        %v1596 = vlaneseq
        %v1597 = vshrl.u32 %v1596, 7
        %v1598 = vsub.s32 1, %v1597
        %v1599 = vrot.slane %v1590, %v1598
        %v1618 = vunpack.c.l.b16 %v1574
        %v1619 = vunpack.c.h.b16 %v1574
        %v1620 = vunpack.c.l.b16 %v1575
        %v1621 = vunpack.c.h.b16 %v1575
        %v1622 = vunpack.c.l.b16 %v1576
        %v1623 = vunpack.c.h.b16 %v1576
        %v1624 = vunpack.c.l.b16 %v1577
        %v1625 = vunpack.c.h.b16 %v1577
        %v1626 = vunpack.c.l.b16 %v1578
        %v1627 = vunpack.c.h.b16 %v1578
        %v1628 = vunpack.c.l.b16 %v1579
        %v1629 = vunpack.c.h.b16 %v1579
        %v1630 = vunpack.c.l.b16 %v1580
        %v1631 = vunpack.c.h.b16 %v1580
        %v1632 = vunpack.c.l.b16 %v1581
        %v1633 = vunpack.c.h.b16 %v1581
        %v1634 = vunpack.c.l.b16 %v1582
        %v1635 = vunpack.c.h.b16 %v1582
        %v1636 = vunpack.c.l.b16 %v1583
        %v1637 = vunpack.c.h.b16 %v1583
        %v1638 = vunpack.c.l.b16 %v1584
        %v1639 = vunpack.c.h.b16 %v1584
        %v1640 = vunpack.c.l.b16 %v1585
        %v1641 = vunpack.c.h.b16 %v1585
        %v1642 = vunpack.c.l.b16 %v1586
        %v1643 = vunpack.c.h.b16 %v1586
        %v1644 = vunpack.c.l.b16 %v1587
        %v1645 = vunpack.c.h.b16 %v1587
        %v1646 = vunpack.c.l.b16 %v1588
        %v1647 = vunpack.c.h.b16 %v1588
        %v1648 = vunpack.c.l.b16 %v1589
        %v1649 = vunpack.c.h.b16 %v1589
        %v1650 = vpack.c.b16 %v1620, %v1618
        %v1651 = vpack.c.b16 %v1621, %v1619
        %v1652 = vpack.c.b16 %v1624, %v1622
        %v1653 = vpack.c.b16 %v1625, %v1623
        %v1654 = vpack.c.b16 %v1628, %v1626
        %v1655 = vpack.c.b16 %v1629, %v1627
        %v1656 = vpack.c.b16 %v1632, %v1630
        %v1657 = vpack.c.b16 %v1633, %v1631
        %v1658 = vpack.c.b16 %v1636, %v1634
        %v1659 = vpack.c.b16 %v1637, %v1635
        %v1660 = vpack.c.b16 %v1640, %v1638
        %v1661 = vpack.c.b16 %v1641, %v1639
        %v1662 = vpack.c.b16 %v1644, %v1642
        %v1663 = vpack.c.b16 %v1645, %v1643
        %v1664 = vpack.c.b16 %v1648, %v1646
        %v1665 = vpack.c.b16 %v1649, %v1647
        %1682 = vmatprep.subr.bf16.mxu0 %v1651
        %1683 = vmatpush1.bf16.msra.mxu0 %v1650
        %1684 = vmatprep.subr.bf16.mxu0 %v1653
        %1685 = vmatpush1.bf16.msra.mxu0 %v1652
        %1686 = vmatprep.subr.bf16.mxu0 %v1655
        %1687 = vmatpush1.bf16.msra.mxu0 %v1654
        %1688 = vmatprep.subr.bf16.mxu0 %v1657
        %1689 = vmatpush1.bf16.msra.mxu0 %v1656
        %1690 = vmatprep.subr.bf16.mxu0 %v1659
        %1691 = vmatpush1.bf16.msra.mxu0 %v1658
        %1692 = vmatprep.subr.bf16.mxu0 %v1661
        %1693 = vmatpush1.bf16.msra.mxu0 %v1660
        %1694 = vmatprep.subr.bf16.mxu0 %v1663
        %1695 = vmatpush1.bf16.msra.mxu0 %v1662
        %1696 = vmatprep.subr.bf16.mxu0 %v1665
        %1697 = vmatpush1.bf16.msra.mxu0 %v1664
        %1698 = vmatprep.subr.bf16.mxu0 0
        %1699 = vmatpush1.bf16.msra.mxu0 0
        %1700 = vmatprep.subr.bf16.mxu0 0
        %1701 = vmatpush1.bf16.msra.mxu0 0
        %1702 = vmatprep.subr.bf16.mxu0 0
        %1703 = vmatpush1.bf16.msra.mxu0 0
        %1704 = vmatprep.subr.bf16.mxu0 0
        %1705 = vmatpush1.bf16.msra.mxu0 0
        %1706 = vmatprep.subr.bf16.mxu0 0
        %1707 = vmatpush1.bf16.msra.mxu0 0
        %1708 = vmatprep.subr.bf16.mxu0 0
        %1709 = vmatpush1.bf16.msra.mxu0 0
        %1710 = vmatprep.subr.bf16.mxu0 0
        %1711 = vmatpush1.bf16.msra.mxu0 0
        %1712 = vmatprep.subr.bf16.mxu0 0
        %1713 = vmatpush1.bf16.msra.mxu0 0
        %1714 = vmatprep.mubr.bf16.mxu0 0
        %1715 = vmatmul.mubr.bf16.gmra.mrb[0].mxu0 %v619
        %v1716 = vpop.f32.mrb[0].mxu0
        %v1717 = vadd.f32 %v1595, %v1716
        %v1718 = vpop.f32.mrb[0].mxu0
        %v1719 = vadd.f32 %v1599, %v1718
        %v1720 = vpop.f32.mrb[0].mxu0
        %v1721 = vpop.f32.mrb[0].mxu0
        %1722 = vdwg.mxu0
        %v1723 = vadd.f32 %v1717, 1.0
        %v1724 = vmul.f32 %v1723, %v1573
        %v1725 = vadd.f32 %v1724, %v1719
        %v1726 = vmul.f32 %v1725, %v628
        %v1727 = vpack.c.bf16 %v1726, %v1726
        %v1728 = vld [vmem:[#allocation12] sm:$0xf]
        %v1729 = vld [vmem:[#allocation12 + $0x4] sm:$0xf]
        %v1730 = vld [vmem:[#allocation12 + $0x8] sm:$0xf]
        %v1731 = vld [vmem:[#allocation12 + $0xc] sm:$0xf]
        %v1732 = vld [vmem:[#allocation12 + $0x10] sm:$0xf]
        %v1733 = vld [vmem:[#allocation12 + $0x14] sm:$0xf]
        %v1734 = vld [vmem:[#allocation12 + $0x18] sm:$0xf]
        %v1735 = vld [vmem:[#allocation12 + $0x1c] sm:$0xf]
        %v1736 = vld [vmem:[#allocation12 + $0x20] sm:$0xf]
        %v1737 = vld [vmem:[#allocation12 + $0x24] sm:$0xf]
        %v1738 = vld [vmem:[#allocation12 + $0x28] sm:$0xf]
        %v1739 = vld [vmem:[#allocation12 + $0x2c] sm:$0xf]
        %v1740 = vld [vmem:[#allocation12 + $0x30] sm:$0xf]
        %v1741 = vld [vmem:[#allocation12 + $0x34] sm:$0xf]
        %v1742 = vld [vmem:[#allocation12 + $0x38] sm:$0xf]
        %v1743 = vld [vmem:[#allocation12 + $0x3c] sm:$0xf]
        %v1744 = vld [vmem:[%s9] sm:$0x1]
        %v1746 = vlaneseq
        %v1747 = vshrl.u32 %v1746, 7
        %v1748 = vsub.s32 0, %v1747
        %v1749 = vrot.slane %v1744, %v1748
        %v1767 = vunpack.c.l.b16 %v1728
        %v1768 = vunpack.c.l.b16 %v1729
        %v1769 = vunpack.c.l.b16 %v1730
        %v1770 = vunpack.c.l.b16 %v1731
        %v1771 = vunpack.c.l.b16 %v1732
        %v1772 = vunpack.c.l.b16 %v1733
        %v1773 = vunpack.c.l.b16 %v1734
        %v1774 = vunpack.c.l.b16 %v1735
        %v1775 = vunpack.c.l.b16 %v1736
        %v1776 = vunpack.c.l.b16 %v1737
        %v1777 = vunpack.c.l.b16 %v1738
        %v1778 = vunpack.c.l.b16 %v1739
        %v1779 = vunpack.c.l.b16 %v1740
        %v1780 = vunpack.c.l.b16 %v1741
        %v1781 = vunpack.c.l.b16 %v1742
        %v1782 = vunpack.c.l.b16 %v1743
        %v1783 = vpack.c.b16 %v1768, %v1767
        %v1784 = vpack.c.b16 %v1770, %v1769
        %v1785 = vpack.c.b16 %v1772, %v1771
        %v1786 = vpack.c.b16 %v1774, %v1773
        %v1787 = vpack.c.b16 %v1776, %v1775
        %v1788 = vpack.c.b16 %v1778, %v1777
        %v1789 = vpack.c.b16 %v1780, %v1779
        %v1790 = vpack.c.b16 %v1782, %v1781
        %1799 = vmatprep.subr.bf16.mxu0 0
        %1800 = vmatpush1.bf16.msra.mxu0 %v1783
        %1801 = vmatprep.subr.bf16.mxu0 0
        %1802 = vmatpush1.bf16.msra.mxu0 %v1784
        %1803 = vmatprep.subr.bf16.mxu0 0
        %1804 = vmatpush1.bf16.msra.mxu0 %v1785
        %1805 = vmatprep.subr.bf16.mxu0 0
        %1806 = vmatpush1.bf16.msra.mxu0 %v1786
        %1807 = vmatprep.subr.bf16.mxu0 0
        %1808 = vmatpush1.bf16.msra.mxu0 %v1787
        %1809 = vmatprep.subr.bf16.mxu0 0
        %1810 = vmatpush1.bf16.msra.mxu0 %v1788
        %1811 = vmatprep.subr.bf16.mxu0 0
        %1812 = vmatpush1.bf16.msra.mxu0 %v1789
        %1813 = vmatprep.subr.bf16.mxu0 0
        %1814 = vmatpush1.bf16.msra.mxu0 %v1790
        %1815 = vmatprep.subr.bf16.mxu0 0
        %1816 = vmatpush1.bf16.msra.mxu0 0
        %1817 = vmatprep.subr.bf16.mxu0 0
        %1818 = vmatpush1.bf16.msra.mxu0 0
        %1819 = vmatprep.subr.bf16.mxu0 0
        %1820 = vmatpush1.bf16.msra.mxu0 0
        %1821 = vmatprep.subr.bf16.mxu0 0
        %1822 = vmatpush1.bf16.msra.mxu0 0
        %1823 = vmatprep.subr.bf16.mxu0 0
        %1824 = vmatpush1.bf16.msra.mxu0 0
        %1825 = vmatprep.subr.bf16.mxu0 0
        %1826 = vmatpush1.bf16.msra.mxu0 0
        %1827 = vmatprep.subr.bf16.mxu0 0
        %1828 = vmatpush1.bf16.msra.mxu0 0
        %1829 = vmatprep.subr.bf16.mxu0 0
        %1830 = vmatpush1.bf16.msra.mxu0 0
        %1831 = vmatprep.mubr.bf16.mxu0 0
        %1832 = vmatmul.mubr.bf16.gmra.mrb[0].mxu0 %v1727
        %v1833 = vpop.f32.mrb[0].mxu0
        %v1834 = vadd.f32 %v1749, %v1833
        %v1835 = vpop.f32.mrb[0].mxu0
        %v1836 = vpop.f32.mrb[0].mxu0
        %v1837 = vpop.f32.mrb[0].mxu0
        %1838 = vdwg.mxu0
        %v1839 = vmax.f32 %v1834, 0.0
        %v1840 = vmul.f32 %v1839, %v628
        %v1841 = vpack.c.bf16 %v1840, %v1840
        %v1842 = vld [vmem:[#allocation13] sm:$0xf]
        %v1843 = vld [vmem:[#allocation13 + $0x4] sm:$0xf]
        %v1844 = vld [vmem:[#allocation13 + $0x8] sm:$0xf]
        %v1845 = vld [vmem:[#allocation13 + $0xc] sm:$0xf]
        %v1846 = vld [vmem:[#allocation13 + $0x10] sm:$0xf]
        %v1847 = vld [vmem:[#allocation13 + $0x14] sm:$0xf]
        %v1848 = vld [vmem:[#allocation13 + $0x18] sm:$0xf]
        %v1849 = vld [vmem:[#allocation13 + $0x1c] sm:$0xf]
        %v1850 = vld [vmem:[#allocation13 + $0x20] sm:$0xf]
        %v1851 = vld [vmem:[#allocation13 + $0x24] sm:$0xf]
        %v1852 = vld [vmem:[#allocation13 + $0x28] sm:$0xf]
        %v1853 = vld [vmem:[#allocation13 + $0x2c] sm:$0xf]
        %v1854 = vld [vmem:[#allocation13 + $0x30] sm:$0xf]
        %v1855 = vld [vmem:[#allocation13 + $0x34] sm:$0xf]
        %v1856 = vld [vmem:[#allocation13 + $0x38] sm:$0xf]
        %v1857 = vld [vmem:[#allocation13 + $0x3c] sm:$0xf]
        %v1858 = vld [vmem:[%s11] sm:$0x1]
        %v1860 = vlaneseq
        %v1861 = vshrl.u32 %v1860, 7
        %v1862 = vsub.s32 0, %v1861
        %v1863 = vrot.slane %v1858, %v1862
        %v1881 = vunpack.c.l.b16 %v1842
        %v1882 = vunpack.c.l.b16 %v1843
        %v1883 = vunpack.c.l.b16 %v1844
        %v1884 = vunpack.c.l.b16 %v1845
        %v1885 = vunpack.c.l.b16 %v1846
        %v1886 = vunpack.c.l.b16 %v1847
        %v1887 = vunpack.c.l.b16 %v1848
        %v1888 = vunpack.c.l.b16 %v1849
        %v1889 = vunpack.c.l.b16 %v1850
        %v1890 = vunpack.c.l.b16 %v1851
        %v1891 = vunpack.c.l.b16 %v1852
        %v1892 = vunpack.c.l.b16 %v1853
        %v1893 = vunpack.c.l.b16 %v1854
        %v1894 = vunpack.c.l.b16 %v1855
        %v1895 = vunpack.c.l.b16 %v1856
        %v1896 = vunpack.c.l.b16 %v1857
        %v1897 = vpack.c.b16 %v1882, %v1881
        %v1898 = vpack.c.b16 %v1884, %v1883
        %v1899 = vpack.c.b16 %v1886, %v1885
        %v1900 = vpack.c.b16 %v1888, %v1887
        %v1901 = vpack.c.b16 %v1890, %v1889
        %v1902 = vpack.c.b16 %v1892, %v1891
        %v1903 = vpack.c.b16 %v1894, %v1893
        %v1904 = vpack.c.b16 %v1896, %v1895
        %1913 = vmatprep.subr.bf16.mxu0 0
        %1914 = vmatpush1.bf16.msra.mxu0 %v1897
        %1915 = vmatprep.subr.bf16.mxu0 0
        %1916 = vmatpush1.bf16.msra.mxu0 %v1898
        %1917 = vmatprep.subr.bf16.mxu0 0
        %1918 = vmatpush1.bf16.msra.mxu0 %v1899
        %1919 = vmatprep.subr.bf16.mxu0 0
        %1920 = vmatpush1.bf16.msra.mxu0 %v1900
        %1921 = vmatprep.subr.bf16.mxu0 0
        %1922 = vmatpush1.bf16.msra.mxu0 %v1901
        %1923 = vmatprep.subr.bf16.mxu0 0
        %1924 = vmatpush1.bf16.msra.mxu0 %v1902
        %1925 = vmatprep.subr.bf16.mxu0 0
        %1926 = vmatpush1.bf16.msra.mxu0 %v1903
        %1927 = vmatprep.subr.bf16.mxu0 0
        %1928 = vmatpush1.bf16.msra.mxu0 %v1904
        %1929 = vmatprep.subr.bf16.mxu0 0
        %1930 = vmatpush1.bf16.msra.mxu0 0
        %1931 = vmatprep.subr.bf16.mxu0 0
        %1932 = vmatpush1.bf16.msra.mxu0 0
        %1933 = vmatprep.subr.bf16.mxu0 0
        %1934 = vmatpush1.bf16.msra.mxu0 0
        %1935 = vmatprep.subr.bf16.mxu0 0
        %1936 = vmatpush1.bf16.msra.mxu0 0
        %1937 = vmatprep.subr.bf16.mxu0 0
        %1938 = vmatpush1.bf16.msra.mxu0 0
        %1939 = vmatprep.subr.bf16.mxu0 0
        %1940 = vmatpush1.bf16.msra.mxu0 0
        %1941 = vmatprep.subr.bf16.mxu0 0
        %1942 = vmatpush1.bf16.msra.mxu0 0
        %1943 = vmatprep.subr.bf16.mxu0 0
        %1944 = vmatpush1.bf16.msra.mxu0 0
        %1945 = vmatprep.mubr.bf16.mxu0 0
        %1946 = vmatmul.mubr.bf16.gmra.mrb[0].mxu0 %v1841
        %v1947 = vpop.f32.mrb[0].mxu0
        %v1948 = vadd.f32 %v1863, %v1947
        %v1949 = vpop.f32.mrb[0].mxu0
        %v1950 = vpop.f32.mrb[0].mxu0
        %v1951 = vpop.f32.mrb[0].mxu0
        %1952 = vdwg.mxu0
        %v1953 = vmul.f32 %v1948, %v628
        %v1954 = vadd.f32 %v1725, %v1953
        %v1955 = vmul.f32 %v1954, %v628
        %v1956 = vrot.slane %v1955, 4
        %v1957 = vadd.f32 %v1955, %v1956
        %v1958 = vrot.slane %v1957, 2
        %v1959 = vadd.f32 %v1957, %v1958
        %v1960 = vrot.slane %v1959, 1
        %v1961 = vadd.f32 %v1959, %v1960
        %v1962 = vmul.f32 %v1961, %v1486
        %v1963 = vsub.f32 %v1954, %v1962
        %v1964 = vmul.f32 %v1963, %v628
        %v1965 = vmul.f32 %v1964, %v1964
        %v1968 = vrot.slane %v1964, 1
        %v1969 = vsel %vm1494, %v1495, %v1968
        %v1970 = vrot.slane %v1965, 1
        %v1971 = vsel %vm1494, %v1495, %v1970
        %v1972 = vsel %vm1494, %v1968, %v1495
        %v1973 = vsel %vm1494, %v1970, %v1495
        %v1978 = vadd.f32 %v1969, 0.0
        %v1979 = vadd.f32 %v1971, 0.0
        %v1980 = vadd.f32 %v1964, %v1972
        %v1981 = vadd.f32 %v1965, %v1973
        %v1986 = vrot.slane %v1978, 2
        %v1987 = vrot.slane %v1980, 2
        %v1988 = vsel %vm1518, %v1986, %v1987
        %v1989 = vrot.slane %v1979, 2
        %v1990 = vrot.slane %v1981, 2
        %v1991 = vsel %vm1518, %v1989, %v1990
        %v1992 = vsel %vm1518, %v1987, %v1525
        %v1993 = vsel %vm1518, %v1990, %v1525
        %v1998 = vadd.f32 %v1978, %v1988
        %v1999 = vadd.f32 %v1979, %v1991
        %v2000 = vadd.f32 %v1980, %v1992
        %v2001 = vadd.f32 %v1981, %v1993
        %v2006 = vrot.slane %v1998, 4
        %v2007 = vrot.slane %v2000, 4
        %v2008 = vsel %vm1135, %v2006, %v2007
        %v2009 = vrot.slane %v1999, 4
        %v2010 = vrot.slane %v2001, 4
        %v2011 = vsel %vm1135, %v2009, %v2010
        %v2012 = vsel %vm1135, %v2007, %v1550
        %v2013 = vsel %vm1135, %v2010, %v1550
        %v2018 = vadd.f32 %v1998, %v2008
        %v2019 = vadd.f32 %v1999, %v2011
        %v2020 = vadd.f32 %v2000, %v2012
        %v2021 = vadd.f32 %v2001, %v2013
        %v2022 = vadd.f32 %v2018, %v2020
        %v2023 = vadd.f32 %v2019, %v2021
        %v2024 = vadd.f32 %v2022, 0.0
        %v2025 = vadd.f32 %v2023, 0.0
        %v2026 = vmul.f32 %v2024, %v1471
        %v2027 = vmul.f32 %v2025, %v1471
        %v2028 = vmul.f32 %v2026, %v2026
        %v2029 = vsub.f32 %v2027, %v2028
        %v2030 = vmax.f32 %v2029, 0.0
        %v2031 = vsub.f32 %v1963, %v2026
        %v2032 = vadd.f32 %v2030, 1e-05
        %v2033 = vrsqrt.pop %v2032
        %v2034 = vmul.f32 %v2031, %v2033
        %v2035 = vld [vmem:[#allocation15] sm:$0xff]
        %v2036 = vld [vmem:[#allocation15 + $0x8] sm:$0xff]
        %v2037 = vld [vmem:[#allocation15 + $0x10] sm:$0xff]
        %v2038 = vld [vmem:[#allocation15 + $0x18] sm:$0xff]
        %v2039 = vld [vmem:[#allocation15 + $0x20] sm:$0xff]
        %v2040 = vld [vmem:[#allocation15 + $0x28] sm:$0xff]
        %v2041 = vld [vmem:[#allocation15 + $0x30] sm:$0xff]
        %v2042 = vld [vmem:[#allocation15 + $0x38] sm:$0xff]
        %v2043 = vld [vmem:[#allocation15 + $0x40] sm:$0xff]
        %v2044 = vld [vmem:[#allocation15 + $0x48] sm:$0xff]
        %v2045 = vld [vmem:[#allocation15 + $0x50] sm:$0xff]
        %v2046 = vld [vmem:[#allocation15 + $0x58] sm:$0xff]
        %v2047 = vld [vmem:[#allocation15 + $0x60] sm:$0xff]
        %v2048 = vld [vmem:[#allocation15 + $0x68] sm:$0xff]
        %v2049 = vld [vmem:[#allocation15 + $0x70] sm:$0xff]
        %v2050 = vld [vmem:[#allocation15 + $0x78] sm:$0xff]
        %v2051 = vld [vmem:[%s13] sm:$0x3]
        %v2053 = vlaneseq
        %v2054 = vshrl.u32 %v2053, 7
        %v2055 = vsub.s32 0, %v2054
        %v2056 = vrot.slane %v2051, %v2055
        %v2057 = vlaneseq
        %v2058 = vshrl.u32 %v2057, 7
        %v2059 = vsub.s32 1, %v2058
        %v2060 = vrot.slane %v2051, %v2059
        %v2079 = vunpack.c.l.b16 %v2035
        %v2080 = vunpack.c.h.b16 %v2035
        %v2081 = vunpack.c.l.b16 %v2036
        %v2082 = vunpack.c.h.b16 %v2036
        %v2083 = vunpack.c.l.b16 %v2037
        %v2084 = vunpack.c.h.b16 %v2037
        %v2085 = vunpack.c.l.b16 %v2038
        %v2086 = vunpack.c.h.b16 %v2038
        %v2087 = vunpack.c.l.b16 %v2039
        %v2088 = vunpack.c.h.b16 %v2039
        %v2089 = vunpack.c.l.b16 %v2040
        %v2090 = vunpack.c.h.b16 %v2040
        %v2091 = vunpack.c.l.b16 %v2041
        %v2092 = vunpack.c.h.b16 %v2041
        %v2093 = vunpack.c.l.b16 %v2042
        %v2094 = vunpack.c.h.b16 %v2042
        %v2095 = vunpack.c.l.b16 %v2043
        %v2096 = vunpack.c.h.b16 %v2043
        %v2097 = vunpack.c.l.b16 %v2044
        %v2098 = vunpack.c.h.b16 %v2044
        %v2099 = vunpack.c.l.b16 %v2045
        %v2100 = vunpack.c.h.b16 %v2045
        %v2101 = vunpack.c.l.b16 %v2046
        %v2102 = vunpack.c.h.b16 %v2046
        %v2103 = vunpack.c.l.b16 %v2047
        %v2104 = vunpack.c.h.b16 %v2047
        %v2105 = vunpack.c.l.b16 %v2048
        %v2106 = vunpack.c.h.b16 %v2048
        %v2107 = vunpack.c.l.b16 %v2049
        %v2108 = vunpack.c.h.b16 %v2049
        %v2109 = vunpack.c.l.b16 %v2050
        %v2110 = vunpack.c.h.b16 %v2050
        %v2111 = vpack.c.b16 %v2081, %v2079
        %v2112 = vpack.c.b16 %v2082, %v2080
        %v2113 = vpack.c.b16 %v2085, %v2083
        %v2114 = vpack.c.b16 %v2086, %v2084
        %v2115 = vpack.c.b16 %v2089, %v2087
        %v2116 = vpack.c.b16 %v2090, %v2088
        %v2117 = vpack.c.b16 %v2093, %v2091
        %v2118 = vpack.c.b16 %v2094, %v2092
        %v2119 = vpack.c.b16 %v2097, %v2095
        %v2120 = vpack.c.b16 %v2098, %v2096
        %v2121 = vpack.c.b16 %v2101, %v2099
        %v2122 = vpack.c.b16 %v2102, %v2100
        %v2123 = vpack.c.b16 %v2105, %v2103
        %v2124 = vpack.c.b16 %v2106, %v2104
        %v2125 = vpack.c.b16 %v2109, %v2107
        %v2126 = vpack.c.b16 %v2110, %v2108
        %2143 = vmatprep.subr.bf16.mxu0 %v2112
        %2144 = vmatpush1.bf16.msra.mxu0 %v2111
        %2145 = vmatprep.subr.bf16.mxu0 %v2114
        %2146 = vmatpush1.bf16.msra.mxu0 %v2113
        %2147 = vmatprep.subr.bf16.mxu0 %v2116
        %2148 = vmatpush1.bf16.msra.mxu0 %v2115
        %2149 = vmatprep.subr.bf16.mxu0 %v2118
        %2150 = vmatpush1.bf16.msra.mxu0 %v2117
        %2151 = vmatprep.subr.bf16.mxu0 %v2120
        %2152 = vmatpush1.bf16.msra.mxu0 %v2119
        %2153 = vmatprep.subr.bf16.mxu0 %v2122
        %2154 = vmatpush1.bf16.msra.mxu0 %v2121
        %2155 = vmatprep.subr.bf16.mxu0 %v2124
        %2156 = vmatpush1.bf16.msra.mxu0 %v2123
        %2157 = vmatprep.subr.bf16.mxu0 %v2126
        %2158 = vmatpush1.bf16.msra.mxu0 %v2125
        %2159 = vmatprep.subr.bf16.mxu0 0
        %2160 = vmatpush1.bf16.msra.mxu0 0
        %2161 = vmatprep.subr.bf16.mxu0 0
        %2162 = vmatpush1.bf16.msra.mxu0 0
        %2163 = vmatprep.subr.bf16.mxu0 0
        %2164 = vmatpush1.bf16.msra.mxu0 0
        %2165 = vmatprep.subr.bf16.mxu0 0
        %2166 = vmatpush1.bf16.msra.mxu0 0
        %2167 = vmatprep.subr.bf16.mxu0 0
        %2168 = vmatpush1.bf16.msra.mxu0 0
        %2169 = vmatprep.subr.bf16.mxu0 0
        %2170 = vmatpush1.bf16.msra.mxu0 0
        %2171 = vmatprep.subr.bf16.mxu0 0
        %2172 = vmatpush1.bf16.msra.mxu0 0
        %2173 = vmatprep.subr.bf16.mxu0 0
        %2174 = vmatpush1.bf16.msra.mxu0 0
        %2175 = vmatprep.mubr.bf16.mxu0 0
        %2176 = vmatmul.mubr.bf16.gmra.mrb[0].mxu0 %v619
        %v2177 = vpop.f32.mrb[0].mxu0
        %v2178 = vadd.f32 %v2056, %v2177
        %v2179 = vpop.f32.mrb[0].mxu0
        %v2180 = vadd.f32 %v2060, %v2179
        %v2181 = vpop.f32.mrb[0].mxu0
        %v2182 = vpop.f32.mrb[0].mxu0
        %2183 = vdwg.mxu0
        %v2184 = vadd.f32 %v2178, 1.0
        %v2185 = vmul.f32 %v2184, %v2034
        %v2186 = vadd.f32 %v2185, %v2180
        %v2187 = vpack.c.bf16 %v2186, %v2186
        %v2188 = vld [vmem:[#allocation16] sm:$0xf]
        %v2189 = vld [vmem:[#allocation16 + $0x4] sm:$0xf]
        %v2190 = vld [vmem:[#allocation16 + $0x8] sm:$0xf]
        %v2191 = vld [vmem:[#allocation16 + $0xc] sm:$0xf]
        %v2192 = vld [vmem:[#allocation16 + $0x10] sm:$0xf]
        %v2193 = vld [vmem:[#allocation16 + $0x14] sm:$0xf]
        %v2194 = vld [vmem:[#allocation16 + $0x18] sm:$0xf]
        %v2195 = vld [vmem:[#allocation16 + $0x1c] sm:$0xf]
        %v2196 = vld [vmem:[#allocation16 + $0x20] sm:$0xf]
        %v2197 = vld [vmem:[#allocation16 + $0x24] sm:$0xf]
        %v2198 = vld [vmem:[#allocation16 + $0x28] sm:$0xf]
        %v2199 = vld [vmem:[#allocation16 + $0x2c] sm:$0xf]
        %v2200 = vld [vmem:[#allocation16 + $0x30] sm:$0xf]
        %v2201 = vld [vmem:[#allocation16 + $0x34] sm:$0xf]
        %v2202 = vld [vmem:[#allocation16 + $0x38] sm:$0xf]
        %v2203 = vld [vmem:[#allocation16 + $0x3c] sm:$0xf]
        %v2204 = vld [vmem:[%s15] sm:$0x1]
        %v2206 = vlaneseq
        %v2207 = vshrl.u32 %v2206, 7
        %v2208 = vsub.s32 0, %v2207
        %v2209 = vrot.slane %v2204, %v2208
        %v2227 = vunpack.c.l.b16 %v2188
        %v2228 = vunpack.c.l.b16 %v2189
        %v2229 = vunpack.c.l.b16 %v2190
        %v2230 = vunpack.c.l.b16 %v2191
        %v2231 = vunpack.c.l.b16 %v2192
        %v2232 = vunpack.c.l.b16 %v2193
        %v2233 = vunpack.c.l.b16 %v2194
        %v2234 = vunpack.c.l.b16 %v2195
        %v2235 = vunpack.c.l.b16 %v2196
        %v2236 = vunpack.c.l.b16 %v2197
        %v2237 = vunpack.c.l.b16 %v2198
        %v2238 = vunpack.c.l.b16 %v2199
        %v2239 = vunpack.c.l.b16 %v2200
        %v2240 = vunpack.c.l.b16 %v2201
        %v2241 = vunpack.c.l.b16 %v2202
        %v2242 = vunpack.c.l.b16 %v2203
        %v2243 = vpack.c.b16 %v2228, %v2227
        %v2244 = vpack.c.b16 %v2230, %v2229
        %v2245 = vpack.c.b16 %v2232, %v2231
        %v2246 = vpack.c.b16 %v2234, %v2233
        %v2247 = vpack.c.b16 %v2236, %v2235
        %v2248 = vpack.c.b16 %v2238, %v2237
        %v2249 = vpack.c.b16 %v2240, %v2239
        %v2250 = vpack.c.b16 %v2242, %v2241
        %2259 = vmatprep.subr.bf16.mxu0 0
        %2260 = vmatpush1.bf16.msra.mxu0 %v2243
        %2261 = vmatprep.subr.bf16.mxu0 0
        %2262 = vmatpush1.bf16.msra.mxu0 %v2244
        %2263 = vmatprep.subr.bf16.mxu0 0
        %2264 = vmatpush1.bf16.msra.mxu0 %v2245
        %2265 = vmatprep.subr.bf16.mxu0 0
        %2266 = vmatpush1.bf16.msra.mxu0 %v2246
        %2267 = vmatprep.subr.bf16.mxu0 0
        %2268 = vmatpush1.bf16.msra.mxu0 %v2247
        %2269 = vmatprep.subr.bf16.mxu0 0
        %2270 = vmatpush1.bf16.msra.mxu0 %v2248
        %2271 = vmatprep.subr.bf16.mxu0 0
        %2272 = vmatpush1.bf16.msra.mxu0 %v2249
        %2273 = vmatprep.subr.bf16.mxu0 0
        %2274 = vmatpush1.bf16.msra.mxu0 %v2250
        %2275 = vmatprep.subr.bf16.mxu0 0
        %2276 = vmatpush1.bf16.msra.mxu0 0
        %2277 = vmatprep.subr.bf16.mxu0 0
        %2278 = vmatpush1.bf16.msra.mxu0 0
        %2279 = vmatprep.subr.bf16.mxu0 0
        %2280 = vmatpush1.bf16.msra.mxu0 0
        %2281 = vmatprep.subr.bf16.mxu0 0
        %2282 = vmatpush1.bf16.msra.mxu0 0
        %2283 = vmatprep.subr.bf16.mxu0 0
        %2284 = vmatpush1.bf16.msra.mxu0 0
        %2285 = vmatprep.subr.bf16.mxu0 0
        %2286 = vmatpush1.bf16.msra.mxu0 0
        %2287 = vmatprep.subr.bf16.mxu0 0
        %2288 = vmatpush1.bf16.msra.mxu0 0
        %2289 = vmatprep.subr.bf16.mxu0 0
        %2290 = vmatpush1.bf16.msra.mxu0 0
        %2291 = vmatprep.mubr.bf16.mxu0 0
        %2292 = vmatmul.mubr.bf16.gmra.mrb[0].mxu0 %v2187
        %v2293 = vpop.f32.mrb[0].mxu0
        %v2294 = vadd.f32 %v2209, %v2293
        %v2295 = vpop.f32.mrb[0].mxu0
        %v2296 = vpop.f32.mrb[0].mxu0
        %v2297 = vpop.f32.mrb[0].mxu0
        %2298 = vdwg.mxu0
        %vm2299 = vcmp.ge.s32.totalorder %v624, 32
        %vm2300 = vcmp.lt.s32.totalorder %v624, 48
        %vm2301 = vmand %vm2299, %vm2300
        %v2302 = vsel %vm2301, 1, 0
        %v2303 = vcvt.s32.f32 %v2302
        %v2304 = vmul.f32 %v620, %v2303
        %v2305 = vadd.f32 %v2294, %v2304
        %v2306 = vpack.c.bf16 %v2305, %v2305
        %2307 = vst [vmem:[%s616] sm:$0xf] %v2306
        %s2308 = sand.u32 %s369, 1
        %s2309 = scalar_lea.sflag [#allocation6], %s2308
        %s2310 = sand.u32 %s369, 1
        %s2311 = smul.addr %s2310, 4
        %s2312 = scalar_lea.vmem [#allocation18], %s2311
        // Predicated region
        $region113: #{tpu_custom_call.1} parent=79 // pred_check
          %p2313 = pneg %p379
        $region114: #{tpu_custom_call.1} parent=79 // pred_check_branch
          %2315 = sbr.rel (%p2313) target = $region116
        $region115: #{tpu_custom_call.1} parent=79 // pred_region
          %s2317 = ssub.s32 64, 64
          %2318 = vsyncadd %s2309, %s2317
          %s2319 = smul.addr %s41, 64
          %s2320 = scalar_lea.hbm %s16, %s2319
          %s2322 = sshll.u32 %s2312, 4
          %s2323 = int_to_ptr.vmem [resolvable:$true] %s2322
          %2325 = dma.vmem_to_hbm [thread:$0]  %s2323, 64, %s2320, %s2309
        $region116: #{tpu_custom_call.1} parent=79 // pred_fallthru
          _
      $region80: #{tpu_custom_call.1} parent=5 // pred_fallthru
        _
      %p2326 = scmp.le.s32.totalorder 2, %s36
      // Predicated region
      $region117: #{tpu_custom_call.1} parent=5 // pred_check
        %p2327 = pneg %p2326
      $region118: #{tpu_custom_call.1} parent=5 // pred_check_branch
        %2329 = sbr.rel (%p2327) target = $region120
      $region119: #{tpu_custom_call.1} parent=5 // pred_region
        %s2330 = ssub.s32 %s36, 2
        // Predicated region
        $region121: #{tpu_custom_call.1} parent=119 // pred_check
          %p2331 = pneg %p385
        $region122: #{tpu_custom_call.1} parent=119 // pred_check_branch
          %2333 = sbr.rel (%p2331) target = $region124
        $region123: #{tpu_custom_call.1} parent=119 // pred_region
          %s2334 = sand.u32 %s370, 1
          %s2335 = scalar_lea.sflag [#allocation6], %s2334
          %s2336 = sand.u32 %s370, 1
          %s2337 = smul.addr %s2336, 4
          %s2338 = scalar_lea.vmem [#allocation18], %s2337
          %2339 = dma.done %s2335, 64
        $region124: #{tpu_custom_call.1} parent=119 // pred_fallthru
          _
      $region120: #{tpu_custom_call.1} parent=5 // pred_fallthru
        _
    $region6: #{tpu_custom_call.1} parent=1 // loop_footer
      %s40 = sadd.s32 1, %s36
    $region7: #{tpu_custom_call.1} parent=1 // loop_footer_branch
      %35 = sbr.rel target = $region3
    $region8: #{tpu_custom_call.1} parent=1 // loop_exit
      _
    %2340 = vsyncpa [#allocation5], 1
    %s2341 = scalar_lea.sflag [#allocation5], 1
    %2342 = vsyncpa %s2341, 1
    %2343 = vsyncpa [#allocation8], 1
    %2344 = vsyncpa [#allocation11], 1
    %2345 = vsyncpa [#allocation14], 1
    %2346 = vsyncpa [#allocation17], 1
    %2347 = vsyncpa [#allocation6], 1
    %s2348 = scalar_lea.sflag [#allocation6], 1
    %2349 = vsyncpa %s2348, 1

</llo_original>
